<compile_context>
chip_gen: v6e
topology: v6e:2x2x1
jax: 0.10.0
libtpu: 0.0.40
codegen_flags: <defaults>
</compile_context>

<pallas_src>
import math

import jax
import jax.numpy as jnp
import numpy as np
from jax import lax
from jax.experimental import pallas as pl
from jax.experimental.pallas import tpu as pltpu

# ---------------- config implied by SingleMambaBlockimage(dim=32) ------------
D_MODEL = 32
EXPAND = 1
D_INNER = EXPAND * D_MODEL                 # 32
D_STATE = 8
D_CONV = 4
DT_RANK = math.ceil(D_MODEL / 16)          # 2
BATCH = 2
SEQ = 8
LN_EPS = 1e-5

N_GROUP = 2 * BATCH                        # (batch x direction) lane groups = 4
LANES = N_GROUP * D_INNER                  # 128  (exactly one vreg wide)
XDBL = DT_RANK + 2 * D_STATE               # 18


def _silu(x):
    return x * jax.nn.sigmoid(x)


def single_mamba_kernel(x_ref, skip_ref, lnw_ref, lnb_ref, w_in_ref,
                        conv_w_ref, conv_b_ref, w_xdbl_ref, dt_b_ref,
                        a_negT_ref, d_ref, w_out_ref, out_ref):
    B, L, n, di = BATCH, SEQ, D_STATE, D_INNER
    f32 = jnp.float32

    # ---- LayerNorm on the [b0 fwd; b1 fwd; b0 rev; b1 rev] row stack (R2) ----
    xs = x_ref[...]                                          # (4L, D) = (32,32)
    mu = jnp.mean(xs, axis=-1, keepdims=True)
    xc = xs - mu
    var = jnp.mean(xc * xc, axis=-1, keepdims=True)
    h = xc * lax.rsqrt(var + LN_EPS) * lnw_ref[...] + lnb_ref[...]

    # Pack the 4 row groups into lanes: (L, 128) = [b0f | b1f | b0b | b1b].
    h_lanes = jnp.concatenate(
        [h[g * L:(g + 1) * L, :] for g in range(N_GROUP)], axis=1)

    # ---- in_proj: ONE block-diag matmul emits x and z for all 4 groups (R2) --
    xz = jnp.dot(h_lanes, w_in_ref[...], preferred_element_type=f32)  # (L, 256)
    u_pre = xz[:, :LANES]                                    # (L, 128) x path
    z_all = xz[:, LANES:]                                    # (L, 128) gate

    # ---- causal depthwise conv (k=4): zero-prefix sublane shifts -------------
    cw = conv_w_ref[...]                                     # (D_CONV, 128)
    conv_acc = u_pre * cw[D_CONV - 1:, :]
    for j in range(1, D_CONV):
        shifted = jnp.concatenate(
            [jnp.zeros((j, LANES), f32), u_pre[:L - j, :]], axis=0)
        conv_acc = conv_acc + shifted * cw[D_CONV - 1 - j:D_CONV - j, :]
    u_all = _silu(conv_acc + conv_b_ref[...])                # (L, 128)

    # ---- fused x_proj + dt_proj (R1): one matmul -> [delta_pre | B | C] ------
    x_dbl = jnp.dot(u_all, w_xdbl_ref[...], preferred_element_type=f32)  # (L,192)
    delta = jax.nn.softplus(x_dbl[:, :LANES] + dt_b_ref[...])            # (L,128)
    B_small = x_dbl[:, LANES:LANES + N_GROUP * n]                        # (L, 32)
    C_small = x_dbl[:, LANES + N_GROUP * n:]                             # (L, 32)

    # Broadcast the per-group (d_state) B/C over their 32 channels.
    def expand_groups(P):                                    # (L,4n) -> (L,n,128)
        blocks = [jnp.broadcast_to(P[:, g * n:(g + 1) * n][:, :, None],
                                   (L, n, di)) for g in range(N_GROUP)]
        return jnp.concatenate(blocks, axis=2)

    B_bc = expand_groups(B_small)
    C_bc = expand_groups(C_small)

    dA = jnp.exp(delta[:, None, :] * a_negT_ref[...][None, :, :])  # (L, n, 128)
    dU = delta * u_all                                             # (L, 128)

    # ---- selective scan: fully unrolled, state in registers (R4) -------------
    # dBu is formed per step from the single dU vreg instead of precomputing
    # 8 more (n,128) tiles, keeping the serial region spill-free.
    s = jnp.zeros((n, LANES), f32)
    ys = []
    for t in range(L):
        s = dA[t] * s + dU[t:t + 1, :] * B_bc[t]
        ys.append(jnp.sum(s * C_bc[t], axis=0, keepdims=True))    # (1, 128)
    y = jnp.concatenate(ys, axis=0)                               # (L, 128)

    # + u*D skip, gate with SiLU(z) (selective_scan z-gating).
    y = (y + u_all * d_ref[...]) * _silu(z_all)

    # ---- single remaining time reversal (backward half -> forward time) (R3) -
    ri = lax.broadcasted_iota(jnp.int32, (L, L), 0)
    ci = lax.broadcasted_iota(jnp.int32, (L, L), 1)
    J = (ri + ci == L - 1).astype(f32)
    y_bwd = jnp.dot(J, y[:, B * di:], preferred_element_type=f32)
    y_ta = jnp.concatenate([y[:, :B * di], y_bwd], axis=1)        # (L, 128)

    # ---- merged out_proj (folds the (fwd+bwd)/2) + residual ------------------
    out = jnp.dot(y_ta, w_out_ref[...], preferred_element_type=f32)  # (L, B*D)
    out_ref[...] = out + skip_ref[...]


def _merge_params(p):
    """Lane-merged / block-diagonal weights. Lane-group order [b0f,b1f,b0b,b1b]."""
    di, n, r = D_INNER, D_STATE, DT_RANK
    dirs = ["f", "f", "b", "b"]                              # direction per group
    hi = jax.lax.Precision.HIGHEST

    in_wT = p["in_wT"]                                       # (D, 2*di)
    Wx, Wz = in_wT[:, :di], in_wT[:, di:]
    # (128, 256): block-diag Wx into the x half, Wz into the z half (R2).
    w_in = jnp.zeros((LANES, 2 * LANES), jnp.float32)
    for g in range(N_GROUP):
        w_in = w_in.at[di * g:di * (g + 1), di * g:di * (g + 1)].set(Wx)
        w_in = w_in.at[di * g:di * (g + 1),
                       LANES + di * g:LANES + di * (g + 1)].set(Wz)

    def tile_dir(name):
        return jnp.concatenate([p[name + "_" + d] for d in dirs], axis=-1)

    conv_w = tile_dir("conv_w")                              # (D_CONV, 128)
    conv_b = tile_dir("conv_b")[None, :]                     # (1, 128)
    dt_b = tile_dir("dt_b")[None, :]                         # (1, 128)
    d_par = tile_dir("D")[None, :]                           # (1, 128)
    a_negT = jnp.concatenate(
        [(-jnp.exp(p["A_log_" + d])).T for d in dirs], axis=1)   # (n, 128)

    # Fused x_proj+dt_proj (R1): (128, 192) = [128 delta cols | 32 B | 32 C].
    w_xdbl = jnp.zeros((LANES, LANES + 2 * N_GROUP * n), jnp.float32)
    for g, d in enumerate(dirs):
        W = p["xproj_wT_" + d]                               # (di, 18)
        Wdt = p["dt_wT_" + d]                                # (r, di)
        rows = slice(di * g, di * (g + 1))
        fused_dt = jnp.matmul(W[:, :r], Wdt, precision=hi)   # (di, di), exact fuse
        w_xdbl = w_xdbl.at[rows, di * g:di * (g + 1)].set(fused_dt)
        w_xdbl = w_xdbl.at[rows, LANES + n * g:LANES + n * (g + 1)].set(W[:, r:r + n])
        w_xdbl = w_xdbl.at[rows, LANES + N_GROUP * n + n * g:
                                 LANES + N_GROUP * n + n * (g + 1)].set(W[:, r + n:])

    half = 0.5 * p["out_wT"]                                 # fold the /2 in
    Zo = jnp.zeros((di, D_MODEL), jnp.float32)
    rb0 = jnp.concatenate([half, Zo], axis=1)                # batch-0 groups
    rb1 = jnp.concatenate([Zo, half], axis=1)                # batch-1 groups
    w_out = jnp.concatenate([rb0, rb1, rb0, rb1], axis=0)    # (128, B*D)

    return [p["ln_w"][None, :], p["ln_b"][None, :], w_in, conv_w, conv_b,
            w_xdbl, dt_b, a_negT, d_par, w_out]


def single_mamba_block_image(x, params):
    B, L, D = x.shape
    assert (B, L, D) == (BATCH, SEQ, D_MODEL)
    merged = _merge_params(params)

    # Pre-packed inputs (R2 + R8): the time-reversed copy for the bimamba
    # backward stream and the lane-dense residual slab are built by XLA (free
    # relative to kernel launch), so the kernel front has no reversal matmuls
    # and no skip-path row-slice/concat work.
    x_stack = jnp.concatenate([x[0], x[1], x[0, ::-1], x[1, ::-1]], axis=0)  # (4L, D)
    skip_lanes = jnp.concatenate([x[0], x[1]], axis=1)                        # (L, B*D)

    operands = [x_stack, skip_lanes] + merged

    def full_spec(a):
        return pl.BlockSpec(a.shape, lambda i, nd=a.ndim: (0,) * nd)

    out_flat = pl.pallas_call(
        single_mamba_kernel,
        out_shape=jax.ShapeDtypeStruct((L, B * D), jnp.float32),
        grid_spec=pltpu.PrefetchScalarGridSpec(
            num_scalar_prefetch=0,
            grid=(1,),
            in_specs=[full_spec(a) for a in operands],
            out_specs=pl.BlockSpec((L, B * D), lambda i: (0, 0)),
        ),
        # "parallel": widening this axis over independent (B=2,L=8) instances
        # is the intended scaling path (uses both v7x TensorCores, amortizes
        # the per-call / per-grid-step overhead) -- R5/R6.
        compiler_params=pltpu.CompilerParams(
            dimension_semantics=("parallel",)),
    )(*operands)

    # lane-packed (L, B*D) slab -> (B, L, D)
    return out_flat.reshape(L, B, D).transpose(1, 0, 2)


def init_params(key):
    ks = jax.random.split(key, 20)

    def unif(k, shape, bound):
        return jax.random.uniform(k, shape, jnp.float32, -bound, bound)

    di, n, r = D_INNER, D_STATE, DT_RANK
    a_base = jnp.log(jnp.arange(1, n + 1, dtype=jnp.float32))[None, :]
    p = {
        "ln_w": 1.0 + 0.1 * jax.random.normal(ks[0], (D_MODEL,), jnp.float32),
        "ln_b": 0.1 * jax.random.normal(ks[1], (D_MODEL,), jnp.float32),
        "in_wT": unif(ks[2], (D_MODEL, 2 * di), 1.0 / math.sqrt(D_MODEL)),
        "out_wT": unif(ks[3], (di, D_MODEL), 1.0 / math.sqrt(di)),
    }
    for i, d in enumerate(("f", "b")):          # forward / backward streams
        o = 4 + 7 * i
        p["conv_w_" + d] = unif(ks[o + 0], (D_CONV, di), 0.5)
        p["conv_b_" + d] = unif(ks[o + 1], (di,), 0.5)
        p["xproj_wT_" + d] = unif(ks[o + 2], (di, XDBL), 1.0 / math.sqrt(di))
        p["dt_wT_" + d] = unif(ks[o + 3], (r, di), 1.0 / math.sqrt(r))
        p["dt_b_" + d] = unif(ks[o + 4], (di,), 1.0 / math.sqrt(r))
        p["A_log_" + d] = (jnp.broadcast_to(a_base, (di, n))
                           + 0.1 * jax.random.uniform(ks[o + 5], (di, n),
                                                      jnp.float32))
        p["D_" + d] = 1.0 + 0.2 * jax.random.uniform(ks[o + 6], (di,),
                                                     jnp.float32)
    return p


def reference(x, p):
    """Pure-JAX SingleMambaBlockimage forward (bimamba v2, if_devide_out)."""
    B, L, _ = x.shape
    di, n, r = D_INNER, D_STATE, DT_RANK

    def mm(a, b):
        return jnp.matmul(a, b, precision=jax.lax.Precision.HIGHEST)

    mu = x.mean(-1, keepdims=True)
    var = ((x - mu) ** 2).mean(-1, keepdims=True)
    h = (x - mu) * lax.rsqrt(var + LN_EPS) * p["ln_w"] + p["ln_b"]

    xz = mm(h, p["in_wT"])                               # (B, L, 2*di)
    xc, z = xz[..., :di], xz[..., di:]

    def one_direction(u, zz, d):
        cw, cb = p["conv_w_" + d], p["conv_b_" + d]
        up = jnp.pad(u, ((0, 0), (D_CONV - 1, 0), (0, 0)))
        conv = cb[None, None, :]
        for k in range(D_CONV):
            conv = conv + up[:, k:k + L, :] * cw[k][None, None, :]
        ua = jax.nn.silu(conv)
        x_dbl = mm(ua, p["xproj_wT_" + d])
        delta = jax.nn.softplus(mm(x_dbl[..., :r], p["dt_wT_" + d])
                                + p["dt_b_" + d])
        Bm = x_dbl[..., r:r + n]
        Cm = x_dbl[..., r + n:]
        A = -jnp.exp(p["A_log_" + d])                    # (di, n)
        dA = jnp.exp(delta[..., None] * A[None, None, :, :])
        dBu = delta[..., None] * Bm[:, :, None, :] * ua[..., None]
        s = jnp.zeros((B, di, n), jnp.float32)
        ys = []
        for t in range(L):
            s = dA[:, t] * s + dBu[:, t]
            ys.append(jnp.sum(s * Cm[:, t][:, None, :], axis=-1))
        y = jnp.stack(ys, axis=1) + ua * p["D_" + d][None, None, :]
        return y * jax.nn.silu(zz)

    y_f = one_direction(xc, z, "f")
    y_b = one_direction(jnp.flip(xc, axis=1), jnp.flip(z, axis=1), "b")
    y = (y_f + jnp.flip(y_b, axis=1)) * 0.5
    return mm(y, p["out_wT"]) + x


if __name__ == "__main__":
    key = jax.random.PRNGKey(0)
    kx, kp = jax.random.split(key)
    x = jax.random.normal(kx, (BATCH, SEQ, D_MODEL), jnp.float32)
    params = init_params(kp)

    out = single_mamba_block_image(x, params)
    out = jax.block_until_ready(out)

    ref = reference(x, params)
    np.testing.assert_allclose(np.asarray(out), np.asarray(ref),
                               rtol=1e-4, atol=1e-4)
    print("KERNEL_OK")
</pallas_src>

<mosaic_0001>
module attributes {stable_mosaic.version = 11 : i64} {
  func.func @single_mamba_kernel(%arg0: i32, %arg1: memref<32x32xf32, #tpu.memory_space<vmem>>, %arg2: memref<8x64xf32, #tpu.memory_space<vmem>>, %arg3: memref<1x32xf32, #tpu.memory_space<vmem>>, %arg4: memref<1x32xf32, #tpu.memory_space<vmem>>, %arg5: memref<128x256xf32, #tpu.memory_space<vmem>>, %arg6: memref<4x128xf32, #tpu.memory_space<vmem>>, %arg7: memref<1x128xf32, #tpu.memory_space<vmem>>, %arg8: memref<128x192xf32, #tpu.memory_space<vmem>>, %arg9: memref<1x128xf32, #tpu.memory_space<vmem>>, %arg10: memref<8x128xf32, #tpu.memory_space<vmem>>, %arg11: memref<1x128xf32, #tpu.memory_space<vmem>>, %arg12: memref<128x64xf32, #tpu.memory_space<vmem>>, %arg13: memref<8x64xf32, #tpu.memory_space<vmem>>) attributes {dimension_semantics = [#tpu.dimension_semantics<parallel>], iteration_bounds = array<i64: 1>, scalar_prefetch = 0 : i64, scratch_operands = 0 : i64, tpu.core_type = #tpu.core_type<tc>, window_params = [{pipeline_mode = #tpu.pipeline_mode<synchronous>, transform_indices = @transform_0, window_bounds = array<i64: 32, 32>}, {pipeline_mode = #tpu.pipeline_mode<synchronous>, transform_indices = @transform_1, window_bounds = array<i64: 8, 64>}, {pipeline_mode = #tpu.pipeline_mode<synchronous>, transform_indices = @transform_2, window_bounds = array<i64: 1, 32>}, {pipeline_mode = #tpu.pipeline_mode<synchronous>, transform_indices = @transform_3, window_bounds = array<i64: 1, 32>}, {pipeline_mode = #tpu.pipeline_mode<synchronous>, transform_indices = @transform_4, window_bounds = array<i64: 128, 256>}, {pipeline_mode = #tpu.pipeline_mode<synchronous>, transform_indices = @transform_5, window_bounds = array<i64: 4, 128>}, {pipeline_mode = #tpu.pipeline_mode<synchronous>, transform_indices = @transform_6, window_bounds = array<i64: 1, 128>}, {pipeline_mode = #tpu.pipeline_mode<synchronous>, transform_indices = @transform_7, window_bounds = array<i64: 128, 192>}, {pipeline_mode = #tpu.pipeline_mode<synchronous>, transform_indices = @transform_8, window_bounds = array<i64: 1, 128>}, {pipeline_mode = #tpu.pipeline_mode<synchronous>, transform_indices = @transform_9, window_bounds = array<i64: 8, 128>}, {pipeline_mode = #tpu.pipeline_mode<synchronous>, transform_indices = @transform_10, window_bounds = array<i64: 1, 128>}, {pipeline_mode = #tpu.pipeline_mode<synchronous>, transform_indices = @transform_11, window_bounds = array<i64: 128, 64>}, {pipeline_mode = #tpu.pipeline_mode<synchronous>, transform_indices = @transform_12, window_bounds = array<i64: 8, 64>}]} {
    %c0 = arith.constant 0 : index
    %c0_0 = arith.constant 0 : index
    %0 = vector.load %arg1[%c0, %c0_0] : memref<32x32xf32, #tpu.memory_space<vmem>>, vector<32x32xf32>
    %cst = arith.constant dense<0.000000e+00> : vector<32xf32>
    %1 = vector.multi_reduction <add>, %0, %cst [1] : vector<32x32xf32> to vector<32xf32>
    %2 = vector.shape_cast %1 : vector<32xf32> to vector<32x1xf32>
    %cst_1 = arith.constant 3.200000e+01 : f32
    %3 = vector.broadcast %cst_1 : f32 to vector<32x1xf32>
    %4 = arith.divf %2, %3 : vector<32x1xf32>
    %5 = vector.broadcast %4 : vector<32x1xf32> to vector<32x32xf32>
    %6 = arith.subf %0, %5 : vector<32x32xf32>
    %7 = arith.mulf %6, %6 : vector<32x32xf32>
    %cst_2 = arith.constant dense<0.000000e+00> : vector<32xf32>
    %8 = vector.multi_reduction <add>, %7, %cst_2 [1] : vector<32x32xf32> to vector<32xf32>
    %9 = vector.shape_cast %8 : vector<32xf32> to vector<32x1xf32>
    %cst_3 = arith.constant 3.200000e+01 : f32
    %10 = vector.broadcast %cst_3 : f32 to vector<32x1xf32>
    %11 = arith.divf %9, %10 : vector<32x1xf32>
    %cst_4 = arith.constant 9.99999974E-6 : f32
    %12 = vector.broadcast %cst_4 : f32 to vector<32x1xf32>
    %13 = arith.addf %11, %12 : vector<32x1xf32>
    %14 = math.rsqrt %13 : vector<32x1xf32>
    %15 = vector.broadcast %14 : vector<32x1xf32> to vector<32x32xf32>
    %16 = arith.mulf %6, %15 : vector<32x32xf32>
    %c0_5 = arith.constant 0 : index
    %c0_6 = arith.constant 0 : index
    %17 = vector.load %arg3[%c0_5, %c0_6] : memref<1x32xf32, #tpu.memory_space<vmem>>, vector<1x32xf32>
    %18 = vector.broadcast %17 : vector<1x32xf32> to vector<32x32xf32>
    %19 = arith.mulf %16, %18 : vector<32x32xf32>
    %c0_7 = arith.constant 0 : index
    %c0_8 = arith.constant 0 : index
    %20 = vector.load %arg4[%c0_7, %c0_8] : memref<1x32xf32, #tpu.memory_space<vmem>>, vector<1x32xf32>
    %21 = vector.broadcast %20 : vector<1x32xf32> to vector<32x32xf32>
    %22 = arith.addf %19, %21 : vector<32x32xf32>
    %23 = vector.extract_strided_slice %22 {offsets = [0, 0], sizes = [8, 32], strides = [1, 1]} : vector<32x32xf32> to vector<8x32xf32>
    %24 = vector.extract_strided_slice %22 {offsets = [8, 0], sizes = [8, 32], strides = [1, 1]} : vector<32x32xf32> to vector<8x32xf32>
    %25 = vector.extract_strided_slice %22 {offsets = [16, 0], sizes = [8, 32], strides = [1, 1]} : vector<32x32xf32> to vector<8x32xf32>
    %26 = vector.extract_strided_slice %22 {offsets = [24, 0], sizes = [8, 32], strides = [1, 1]} : vector<32x32xf32> to vector<8x32xf32>
    %27 = tpu.concatenate %23, %24, %25, %26 in 1 : vector<8x32xf32>, vector<8x32xf32>, vector<8x32xf32>, vector<8x32xf32> -> vector<8x128xf32>
    %c0_9 = arith.constant 0 : index
    %c0_10 = arith.constant 0 : index
    %28 = vector.load %arg5[%c0_9, %c0_10] : memref<128x256xf32, #tpu.memory_space<vmem>>, vector<128x256xf32>
    %cst_11 = arith.constant dense<0.000000e+00> : vector<8x256xf32>
    %29 = tpu.matmul %27, %28, %cst_11 {dimension_numbers = #tpu.dot_dimension_numbers<[1], [0], [0], [1], [0, 0, 1, 1], [], []>} : vector<8x128xf32>, vector<128x256xf32>, vector<8x256xf32> -> vector<8x256xf32>
    %30 = vector.extract_strided_slice %29 {offsets = [0, 0], sizes = [8, 128], strides = [1, 1]} : vector<8x256xf32> to vector<8x128xf32>
    %31 = vector.extract_strided_slice %29 {offsets = [0, 128], sizes = [8, 128], strides = [1, 1]} : vector<8x256xf32> to vector<8x128xf32>
    %c0_12 = arith.constant 0 : index
    %c0_13 = arith.constant 0 : index
    %32 = vector.load %arg6[%c0_12, %c0_13] : memref<4x128xf32, #tpu.memory_space<vmem>>, vector<4x128xf32>
    %33 = vector.extract_strided_slice %32 {offsets = [3, 0], sizes = [1, 128], strides = [1, 1]} : vector<4x128xf32> to vector<1x128xf32>
    %34 = vector.broadcast %33 : vector<1x128xf32> to vector<8x128xf32>
    %35 = arith.mulf %30, %34 : vector<8x128xf32>
    %cst_14 = arith.constant 0.000000e+00 : f32
    %36 = vector.broadcast %cst_14 : f32 to vector<1x128xf32>
    %37 = vector.extract_strided_slice %30 {offsets = [0, 0], sizes = [7, 128], strides = [1, 1]} : vector<8x128xf32> to vector<7x128xf32>
    %38 = tpu.concatenate %36, %37 in 0 : vector<1x128xf32>, vector<7x128xf32> -> vector<8x128xf32>
    %39 = vector.extract_strided_slice %32 {offsets = [2, 0], sizes = [1, 128], strides = [1, 1]} : vector<4x128xf32> to vector<1x128xf32>
    %40 = vector.broadcast %39 : vector<1x128xf32> to vector<8x128xf32>
    %41 = arith.mulf %38, %40 : vector<8x128xf32>
    %42 = arith.addf %35, %41 : vector<8x128xf32>
    %cst_15 = arith.constant 0.000000e+00 : f32
    %43 = vector.broadcast %cst_15 : f32 to vector<2x128xf32>
    %44 = vector.extract_strided_slice %30 {offsets = [0, 0], sizes = [6, 128], strides = [1, 1]} : vector<8x128xf32> to vector<6x128xf32>
    %45 = tpu.concatenate %43, %44 in 0 : vector<2x128xf32>, vector<6x128xf32> -> vector<8x128xf32>
    %46 = vector.extract_strided_slice %32 {offsets = [1, 0], sizes = [1, 128], strides = [1, 1]} : vector<4x128xf32> to vector<1x128xf32>
    %47 = vector.broadcast %46 : vector<1x128xf32> to vector<8x128xf32>
    %48 = arith.mulf %45, %47 : vector<8x128xf32>
    %49 = arith.addf %42, %48 : vector<8x128xf32>
    %cst_16 = arith.constant 0.000000e+00 : f32
    %50 = vector.broadcast %cst_16 : f32 to vector<3x128xf32>
    %51 = vector.extract_strided_slice %30 {offsets = [0, 0], sizes = [5, 128], strides = [1, 1]} : vector<8x128xf32> to vector<5x128xf32>
    %52 = tpu.concatenate %50, %51 in 0 : vector<3x128xf32>, vector<5x128xf32> -> vector<8x128xf32>
    %53 = vector.extract_strided_slice %32 {offsets = [0, 0], sizes = [1, 128], strides = [1, 1]} : vector<4x128xf32> to vector<1x128xf32>
    %54 = vector.broadcast %53 : vector<1x128xf32> to vector<8x128xf32>
    %55 = arith.mulf %52, %54 : vector<8x128xf32>
    %56 = arith.addf %49, %55 : vector<8x128xf32>
    %c0_17 = arith.constant 0 : index
    %c0_18 = arith.constant 0 : index
    %57 = vector.load %arg7[%c0_17, %c0_18] : memref<1x128xf32, #tpu.memory_space<vmem>>, vector<1x128xf32>
    %58 = vector.broadcast %57 : vector<1x128xf32> to vector<8x128xf32>
    %59 = arith.addf %56, %58 : vector<8x128xf32>
    %60 = arith.negf %59 : vector<8x128xf32>
    %61 = math.exp %60 : vector<8x128xf32>
    %cst_19 = arith.constant 1.000000e+00 : f32
    %62 = vector.broadcast %cst_19 : f32 to vector<8x128xf32>
    %63 = arith.addf %62, %61 : vector<8x128xf32>
    %64 = arith.divf %62, %63 : vector<8x128xf32>
    %65 = arith.mulf %59, %64 : vector<8x128xf32>
    %c0_20 = arith.constant 0 : index
    %c0_21 = arith.constant 0 : index
    %66 = vector.load %arg8[%c0_20, %c0_21] : memref<128x192xf32, #tpu.memory_space<vmem>>, vector<128x192xf32>
    %cst_22 = arith.constant dense<0.000000e+00> : vector<8x192xf32>
    %67 = tpu.matmul %65, %66, %cst_22 {dimension_numbers = #tpu.dot_dimension_numbers<[1], [0], [0], [1], [0, 0, 1, 1], [], []>} : vector<8x128xf32>, vector<128x192xf32>, vector<8x192xf32> -> vector<8x192xf32>
    %68 = vector.extract_strided_slice %67 {offsets = [0, 0], sizes = [8, 128], strides = [1, 1]} : vector<8x192xf32> to vector<8x128xf32>
    %c0_23 = arith.constant 0 : index
    %c0_24 = arith.constant 0 : index
    %69 = vector.load %arg9[%c0_23, %c0_24] : memref<1x128xf32, #tpu.memory_space<vmem>>, vector<1x128xf32>
    %70 = vector.broadcast %69 : vector<1x128xf32> to vector<8x128xf32>
    %71 = arith.addf %68, %70 : vector<8x128xf32>
    %cst_25 = arith.constant 0.000000e+00 : f32
    %72 = vector.broadcast %cst_25 : f32 to vector<8x128xf32>
    %73 = arith.maximumf %71, %72 : vector<8x128xf32>
    %74 = vector.broadcast %cst_25 : f32 to vector<8x128xf32>
    %75 = arith.subf %71, %74 : vector<8x128xf32>
    %76 = arith.cmpf one, %75, %75 : vector<8x128xf32>
    %77 = vector.broadcast %cst_25 : f32 to vector<8x128xf32>
    %78 = arith.addf %71, %77 : vector<8x128xf32>
    %79 = math.absf %75 : vector<8x128xf32>
    %cst_26 = arith.constant 0.000000e+00 : f32
    %80 = vector.broadcast %cst_26 : f32 to vector<8x128xf32>
    %81 = arith.subf %80, %79 : vector<8x128xf32>
    %82 = math.exp %81 : vector<8x128xf32>
    %83 = math.log1p %82 : vector<8x128xf32>
    %84 = arith.addf %73, %83 : vector<8x128xf32>
    %85 = arith.select %76, %78, %84 : vector<8x128xi1>, vector<8x128xf32>
    %86 = vector.extract_strided_slice %67 {offsets = [0, 128], sizes = [8, 32], strides = [1, 1]} : vector<8x192xf32> to vector<8x32xf32>
    %87 = vector.extract_strided_slice %67 {offsets = [0, 160], sizes = [8, 32], strides = [1, 1]} : vector<8x192xf32> to vector<8x32xf32>
    %88 = vector.extract_strided_slice %86 {offsets = [0, 0], sizes = [8, 8], strides = [1, 1]} : vector<8x32xf32> to vector<8x8xf32>
    %89 = vector.shape_cast %88 : vector<8x8xf32> to vector<8x8x1xf32>
    %90 = vector.shape_cast %89 : vector<8x8x1xf32> to vector<8x8x1xf32>
    %91 = vector.broadcast %90 : vector<8x8x1xf32> to vector<8x8x32xf32>
    %92 = vector.extract_strided_slice %86 {offsets = [0, 8], sizes = [8, 8], strides = [1, 1]} : vector<8x32xf32> to vector<8x8xf32>
    %93 = vector.shape_cast %92 : vector<8x8xf32> to vector<8x8x1xf32>
    %94 = vector.shape_cast %93 : vector<8x8x1xf32> to vector<8x8x1xf32>
    %95 = vector.broadcast %94 : vector<8x8x1xf32> to vector<8x8x32xf32>
    %96 = vector.extract_strided_slice %86 {offsets = [0, 16], sizes = [8, 8], strides = [1, 1]} : vector<8x32xf32> to vector<8x8xf32>
    %97 = vector.shape_cast %96 : vector<8x8xf32> to vector<8x8x1xf32>
    %98 = vector.shape_cast %97 : vector<8x8x1xf32> to vector<8x8x1xf32>
    %99 = vector.broadcast %98 : vector<8x8x1xf32> to vector<8x8x32xf32>
    %100 = vector.extract_strided_slice %86 {offsets = [0, 24], sizes = [8, 8], strides = [1, 1]} : vector<8x32xf32> to vector<8x8xf32>
    %101 = vector.shape_cast %100 : vector<8x8xf32> to vector<8x8x1xf32>
    %102 = vector.shape_cast %101 : vector<8x8x1xf32> to vector<8x8x1xf32>
    %103 = vector.broadcast %102 : vector<8x8x1xf32> to vector<8x8x32xf32>
    %104 = tpu.concatenate %91, %95, %99, %103 in 2 : vector<8x8x32xf32>, vector<8x8x32xf32>, vector<8x8x32xf32>, vector<8x8x32xf32> -> vector<8x8x128xf32>
    %105 = vector.extract_strided_slice %87 {offsets = [0, 0], sizes = [8, 8], strides = [1, 1]} : vector<8x32xf32> to vector<8x8xf32>
    %106 = vector.shape_cast %105 : vector<8x8xf32> to vector<8x8x1xf32>
    %107 = vector.shape_cast %106 : vector<8x8x1xf32> to vector<8x8x1xf32>
    %108 = vector.broadcast %107 : vector<8x8x1xf32> to vector<8x8x32xf32>
    %109 = vector.extract_strided_slice %87 {offsets = [0, 8], sizes = [8, 8], strides = [1, 1]} : vector<8x32xf32> to vector<8x8xf32>
    %110 = vector.shape_cast %109 : vector<8x8xf32> to vector<8x8x1xf32>
    %111 = vector.shape_cast %110 : vector<8x8x1xf32> to vector<8x8x1xf32>
    %112 = vector.broadcast %111 : vector<8x8x1xf32> to vector<8x8x32xf32>
    %113 = vector.extract_strided_slice %87 {offsets = [0, 16], sizes = [8, 8], strides = [1, 1]} : vector<8x32xf32> to vector<8x8xf32>
    %114 = vector.shape_cast %113 : vector<8x8xf32> to vector<8x8x1xf32>
    %115 = vector.shape_cast %114 : vector<8x8x1xf32> to vector<8x8x1xf32>
    %116 = vector.broadcast %115 : vector<8x8x1xf32> to vector<8x8x32xf32>
    %117 = vector.extract_strided_slice %87 {offsets = [0, 24], sizes = [8, 8], strides = [1, 1]} : vector<8x32xf32> to vector<8x8xf32>
    %118 = vector.shape_cast %117 : vector<8x8xf32> to vector<8x8x1xf32>
    %119 = vector.shape_cast %118 : vector<8x8x1xf32> to vector<8x8x1xf32>
    %120 = vector.broadcast %119 : vector<8x8x1xf32> to vector<8x8x32xf32>
    %121 = tpu.concatenate %108, %112, %116, %120 in 2 : vector<8x8x32xf32>, vector<8x8x32xf32>, vector<8x8x32xf32>, vector<8x8x32xf32> -> vector<8x8x128xf32>
    %122 = vector.shape_cast %85 : vector<8x128xf32> to vector<8x1x128xf32>
    %c0_27 = arith.constant 0 : index
    %c0_28 = arith.constant 0 : index
    %123 = vector.load %arg10[%c0_27, %c0_28] : memref<8x128xf32, #tpu.memory_space<vmem>>, vector<8x128xf32>
    %124 = vector.shape_cast %123 : vector<8x128xf32> to vector<1x8x128xf32>
    %125 = vector.broadcast %122 : vector<8x1x128xf32> to vector<8x8x128xf32>
    %126 = vector.broadcast %124 : vector<1x8x128xf32> to vector<8x8x128xf32>
    %127 = arith.mulf %125, %126 : vector<8x8x128xf32>
    %128 = math.exp %127 : vector<8x8x128xf32>
    %129 = arith.mulf %85, %65 : vector<8x128xf32>
    %cst_29 = arith.constant 0.000000e+00 : f32
    %130 = vector.broadcast %cst_29 : f32 to vector<8x128xf32>
    %131 = vector.extract_strided_slice %128 {offsets = [0, 0, 0], sizes = [1, 8, 128], strides = [1, 1, 1]} : vector<8x8x128xf32> to vector<1x8x128xf32>
    %132 = vector.shape_cast %131 : vector<1x8x128xf32> to vector<8x128xf32>
    %133 = arith.mulf %132, %130 : vector<8x128xf32>
    %134 = vector.extract_strided_slice %129 {offsets = [0, 0], sizes = [1, 128], strides = [1, 1]} : vector<8x128xf32> to vector<1x128xf32>
    %135 = vector.extract_strided_slice %104 {offsets = [0, 0, 0], sizes = [1, 8, 128], strides = [1, 1, 1]} : vector<8x8x128xf32> to vector<1x8x128xf32>
    %136 = vector.shape_cast %135 : vector<1x8x128xf32> to vector<8x128xf32>
    %137 = vector.broadcast %134 : vector<1x128xf32> to vector<8x128xf32>
    %138 = arith.mulf %137, %136 : vector<8x128xf32>
    %139 = arith.addf %133, %138 : vector<8x128xf32>
    %140 = vector.extract_strided_slice %121 {offsets = [0, 0, 0], sizes = [1, 8, 128], strides = [1, 1, 1]} : vector<8x8x128xf32> to vector<1x8x128xf32>
    %141 = vector.shape_cast %140 : vector<1x8x128xf32> to vector<8x128xf32>
    %142 = arith.mulf %139, %141 : vector<8x128xf32>
    %cst_30 = arith.constant dense<0.000000e+00> : vector<128xf32>
    %143 = vector.multi_reduction <add>, %142, %cst_30 [0] : vector<8x128xf32> to vector<128xf32>
    %144 = vector.shape_cast %143 : vector<128xf32> to vector<1x128xf32>
    %145 = vector.extract_strided_slice %128 {offsets = [1, 0, 0], sizes = [1, 8, 128], strides = [1, 1, 1]} : vector<8x8x128xf32> to vector<1x8x128xf32>
    %146 = vector.shape_cast %145 : vector<1x8x128xf32> to vector<8x128xf32>
    %147 = arith.mulf %146, %139 : vector<8x128xf32>
    %148 = vector.extract_strided_slice %129 {offsets = [1, 0], sizes = [1, 128], strides = [1, 1]} : vector<8x128xf32> to vector<1x128xf32>
    %149 = vector.extract_strided_slice %104 {offsets = [1, 0, 0], sizes = [1, 8, 128], strides = [1, 1, 1]} : vector<8x8x128xf32> to vector<1x8x128xf32>
    %150 = vector.shape_cast %149 : vector<1x8x128xf32> to vector<8x128xf32>
    %151 = vector.broadcast %148 : vector<1x128xf32> to vector<8x128xf32>
    %152 = arith.mulf %151, %150 : vector<8x128xf32>
    %153 = arith.addf %147, %152 : vector<8x128xf32>
    %154 = vector.extract_strided_slice %121 {offsets = [1, 0, 0], sizes = [1, 8, 128], strides = [1, 1, 1]} : vector<8x8x128xf32> to vector<1x8x128xf32>
    %155 = vector.shape_cast %154 : vector<1x8x128xf32> to vector<8x128xf32>
    %156 = arith.mulf %153, %155 : vector<8x128xf32>
    %cst_31 = arith.constant dense<0.000000e+00> : vector<128xf32>
    %157 = vector.multi_reduction <add>, %156, %cst_31 [0] : vector<8x128xf32> to vector<128xf32>
    %158 = vector.shape_cast %157 : vector<128xf32> to vector<1x128xf32>
    %159 = vector.extract_strided_slice %128 {offsets = [2, 0, 0], sizes = [1, 8, 128], strides = [1, 1, 1]} : vector<8x8x128xf32> to vector<1x8x128xf32>
    %160 = vector.shape_cast %159 : vector<1x8x128xf32> to vector<8x128xf32>
    %161 = arith.mulf %160, %153 : vector<8x128xf32>
    %162 = vector.extract_strided_slice %129 {offsets = [2, 0], sizes = [1, 128], strides = [1, 1]} : vector<8x128xf32> to vector<1x128xf32>
    %163 = vector.extract_strided_slice %104 {offsets = [2, 0, 0], sizes = [1, 8, 128], strides = [1, 1, 1]} : vector<8x8x128xf32> to vector<1x8x128xf32>
    %164 = vector.shape_cast %163 : vector<1x8x128xf32> to vector<8x128xf32>
    %165 = vector.broadcast %162 : vector<1x128xf32> to vector<8x128xf32>
    %166 = arith.mulf %165, %164 : vector<8x128xf32>
    %167 = arith.addf %161, %166 : vector<8x128xf32>
    %168 = vector.extract_strided_slice %121 {offsets = [2, 0, 0], sizes = [1, 8, 128], strides = [1, 1, 1]} : vector<8x8x128xf32> to vector<1x8x128xf32>
    %169 = vector.shape_cast %168 : vector<1x8x128xf32> to vector<8x128xf32>
    %170 = arith.mulf %167, %169 : vector<8x128xf32>
    %cst_32 = arith.constant dense<0.000000e+00> : vector<128xf32>
    %171 = vector.multi_reduction <add>, %170, %cst_32 [0] : vector<8x128xf32> to vector<128xf32>
    %172 = vector.shape_cast %171 : vector<128xf32> to vector<1x128xf32>
    %173 = vector.extract_strided_slice %128 {offsets = [3, 0, 0], sizes = [1, 8, 128], strides = [1, 1, 1]} : vector<8x8x128xf32> to vector<1x8x128xf32>
    %174 = vector.shape_cast %173 : vector<1x8x128xf32> to vector<8x128xf32>
    %175 = arith.mulf %174, %167 : vector<8x128xf32>
    %176 = vector.extract_strided_slice %129 {offsets = [3, 0], sizes = [1, 128], strides = [1, 1]} : vector<8x128xf32> to vector<1x128xf32>
    %177 = vector.extract_strided_slice %104 {offsets = [3, 0, 0], sizes = [1, 8, 128], strides = [1, 1, 1]} : vector<8x8x128xf32> to vector<1x8x128xf32>
    %178 = vector.shape_cast %177 : vector<1x8x128xf32> to vector<8x128xf32>
    %179 = vector.broadcast %176 : vector<1x128xf32> to vector<8x128xf32>
    %180 = arith.mulf %179, %178 : vector<8x128xf32>
    %181 = arith.addf %175, %180 : vector<8x128xf32>
    %182 = vector.extract_strided_slice %121 {offsets = [3, 0, 0], sizes = [1, 8, 128], strides = [1, 1, 1]} : vector<8x8x128xf32> to vector<1x8x128xf32>
    %183 = vector.shape_cast %182 : vector<1x8x128xf32> to vector<8x128xf32>
    %184 = arith.mulf %181, %183 : vector<8x128xf32>
    %cst_33 = arith.constant dense<0.000000e+00> : vector<128xf32>
    %185 = vector.multi_reduction <add>, %184, %cst_33 [0] : vector<8x128xf32> to vector<128xf32>
    %186 = vector.shape_cast %185 : vector<128xf32> to vector<1x128xf32>
    %187 = vector.extract_strided_slice %128 {offsets = [4, 0, 0], sizes = [1, 8, 128], strides = [1, 1, 1]} : vector<8x8x128xf32> to vector<1x8x128xf32>
    %188 = vector.shape_cast %187 : vector<1x8x128xf32> to vector<8x128xf32>
    %189 = arith.mulf %188, %181 : vector<8x128xf32>
    %190 = vector.extract_strided_slice %129 {offsets = [4, 0], sizes = [1, 128], strides = [1, 1]} : vector<8x128xf32> to vector<1x128xf32>
    %191 = vector.extract_strided_slice %104 {offsets = [4, 0, 0], sizes = [1, 8, 128], strides = [1, 1, 1]} : vector<8x8x128xf32> to vector<1x8x128xf32>
    %192 = vector.shape_cast %191 : vector<1x8x128xf32> to vector<8x128xf32>
    %193 = vector.broadcast %190 : vector<1x128xf32> to vector<8x128xf32>
    %194 = arith.mulf %193, %192 : vector<8x128xf32>
    %195 = arith.addf %189, %194 : vector<8x128xf32>
    %196 = vector.extract_strided_slice %121 {offsets = [4, 0, 0], sizes = [1, 8, 128], strides = [1, 1, 1]} : vector<8x8x128xf32> to vector<1x8x128xf32>
    %197 = vector.shape_cast %196 : vector<1x8x128xf32> to vector<8x128xf32>
    %198 = arith.mulf %195, %197 : vector<8x128xf32>
    %cst_34 = arith.constant dense<0.000000e+00> : vector<128xf32>
    %199 = vector.multi_reduction <add>, %198, %cst_34 [0] : vector<8x128xf32> to vector<128xf32>
    %200 = vector.shape_cast %199 : vector<128xf32> to vector<1x128xf32>
    %201 = vector.extract_strided_slice %128 {offsets = [5, 0, 0], sizes = [1, 8, 128], strides = [1, 1, 1]} : vector<8x8x128xf32> to vector<1x8x128xf32>
    %202 = vector.shape_cast %201 : vector<1x8x128xf32> to vector<8x128xf32>
    %203 = arith.mulf %202, %195 : vector<8x128xf32>
    %204 = vector.extract_strided_slice %129 {offsets = [5, 0], sizes = [1, 128], strides = [1, 1]} : vector<8x128xf32> to vector<1x128xf32>
    %205 = vector.extract_strided_slice %104 {offsets = [5, 0, 0], sizes = [1, 8, 128], strides = [1, 1, 1]} : vector<8x8x128xf32> to vector<1x8x128xf32>
    %206 = vector.shape_cast %205 : vector<1x8x128xf32> to vector<8x128xf32>
    %207 = vector.broadcast %204 : vector<1x128xf32> to vector<8x128xf32>
    %208 = arith.mulf %207, %206 : vector<8x128xf32>
    %209 = arith.addf %203, %208 : vector<8x128xf32>
    %210 = vector.extract_strided_slice %121 {offsets = [5, 0, 0], sizes = [1, 8, 128], strides = [1, 1, 1]} : vector<8x8x128xf32> to vector<1x8x128xf32>
    %211 = vector.shape_cast %210 : vector<1x8x128xf32> to vector<8x128xf32>
    %212 = arith.mulf %209, %211 : vector<8x128xf32>
    %cst_35 = arith.constant dense<0.000000e+00> : vector<128xf32>
    %213 = vector.multi_reduction <add>, %212, %cst_35 [0] : vector<8x128xf32> to vector<128xf32>
    %214 = vector.shape_cast %213 : vector<128xf32> to vector<1x128xf32>
    %215 = vector.extract_strided_slice %128 {offsets = [6, 0, 0], sizes = [1, 8, 128], strides = [1, 1, 1]} : vector<8x8x128xf32> to vector<1x8x128xf32>
    %216 = vector.shape_cast %215 : vector<1x8x128xf32> to vector<8x128xf32>
    %217 = arith.mulf %216, %209 : vector<8x128xf32>
    %218 = vector.extract_strided_slice %129 {offsets = [6, 0], sizes = [1, 128], strides = [1, 1]} : vector<8x128xf32> to vector<1x128xf32>
    %219 = vector.extract_strided_slice %104 {offsets = [6, 0, 0], sizes = [1, 8, 128], strides = [1, 1, 1]} : vector<8x8x128xf32> to vector<1x8x128xf32>
    %220 = vector.shape_cast %219 : vector<1x8x128xf32> to vector<8x128xf32>
    %221 = vector.broadcast %218 : vector<1x128xf32> to vector<8x128xf32>
    %222 = arith.mulf %221, %220 : vector<8x128xf32>
    %223 = arith.addf %217, %222 : vector<8x128xf32>
    %224 = vector.extract_strided_slice %121 {offsets = [6, 0, 0], sizes = [1, 8, 128], strides = [1, 1, 1]} : vector<8x8x128xf32> to vector<1x8x128xf32>
    %225 = vector.shape_cast %224 : vector<1x8x128xf32> to vector<8x128xf32>
    %226 = arith.mulf %223, %225 : vector<8x128xf32>
    %cst_36 = arith.constant dense<0.000000e+00> : vector<128xf32>
    %227 = vector.multi_reduction <add>, %226, %cst_36 [0] : vector<8x128xf32> to vector<128xf32>
    %228 = vector.shape_cast %227 : vector<128xf32> to vector<1x128xf32>
    %229 = vector.extract_strided_slice %128 {offsets = [7, 0, 0], sizes = [1, 8, 128], strides = [1, 1, 1]} : vector<8x8x128xf32> to vector<1x8x128xf32>
    %230 = vector.shape_cast %229 : vector<1x8x128xf32> to vector<8x128xf32>
    %231 = arith.mulf %230, %223 : vector<8x128xf32>
    %232 = vector.extract_strided_slice %129 {offsets = [7, 0], sizes = [1, 128], strides = [1, 1]} : vector<8x128xf32> to vector<1x128xf32>
    %233 = vector.extract_strided_slice %104 {offsets = [7, 0, 0], sizes = [1, 8, 128], strides = [1, 1, 1]} : vector<8x8x128xf32> to vector<1x8x128xf32>
    %234 = vector.shape_cast %233 : vector<1x8x128xf32> to vector<8x128xf32>
    %235 = vector.broadcast %232 : vector<1x128xf32> to vector<8x128xf32>
    %236 = arith.mulf %235, %234 : vector<8x128xf32>
    %237 = arith.addf %231, %236 : vector<8x128xf32>
    %238 = vector.extract_strided_slice %121 {offsets = [7, 0, 0], sizes = [1, 8, 128], strides = [1, 1, 1]} : vector<8x8x128xf32> to vector<1x8x128xf32>
    %239 = vector.shape_cast %238 : vector<1x8x128xf32> to vector<8x128xf32>
    %240 = arith.mulf %237, %239 : vector<8x128xf32>
    %cst_37 = arith.constant dense<0.000000e+00> : vector<128xf32>
    %241 = vector.multi_reduction <add>, %240, %cst_37 [0] : vector<8x128xf32> to vector<128xf32>
    %242 = vector.shape_cast %241 : vector<128xf32> to vector<1x128xf32>
    %243 = tpu.concatenate %144, %158, %172, %186, %200, %214, %228, %242 in 0 : vector<1x128xf32>, vector<1x128xf32>, vector<1x128xf32>, vector<1x128xf32>, vector<1x128xf32>, vector<1x128xf32>, vector<1x128xf32>, vector<1x128xf32> -> vector<8x128xf32>
    %c0_38 = arith.constant 0 : index
    %c0_39 = arith.constant 0 : index
    %244 = vector.load %arg11[%c0_38, %c0_39] : memref<1x128xf32, #tpu.memory_space<vmem>>, vector<1x128xf32>
    %245 = vector.broadcast %244 : vector<1x128xf32> to vector<8x128xf32>
    %246 = arith.mulf %65, %245 : vector<8x128xf32>
    %247 = arith.addf %243, %246 : vector<8x128xf32>
    %248 = arith.negf %31 : vector<8x128xf32>
    %249 = math.exp %248 : vector<8x128xf32>
    %cst_40 = arith.constant 1.000000e+00 : f32
    %250 = vector.broadcast %cst_40 : f32 to vector<8x128xf32>
    %251 = arith.addf %250, %249 : vector<8x128xf32>
    %252 = arith.divf %250, %251 : vector<8x128xf32>
    %253 = arith.mulf %31, %252 : vector<8x128xf32>
    %254 = arith.mulf %247, %253 : vector<8x128xf32>
    %255 = tpu.iota {dimensions = array<i32: 0>} : vector<8x8xi32>
    %256 = tpu.iota {dimensions = array<i32: 1>} : vector<8x8xi32>
    %257 = arith.addi %255, %256 : vector<8x8xi32>
    %c7_i32 = arith.constant 7 : i32
    %258 = vector.broadcast %c7_i32 : i32 to vector<8x8xi32>
    %259 = arith.cmpi eq, %257, %258 : vector<8x8xi32>
    %260 = arith.extui %259 : vector<8x8xi1> to vector<8x8xi32>
    %261 = arith.sitofp %260 : vector<8x8xi32> to vector<8x8xf32>
    %262 = vector.extract_strided_slice %254 {offsets = [0, 64], sizes = [8, 64], strides = [1, 1]} : vector<8x128xf32> to vector<8x64xf32>
    %cst_41 = arith.constant dense<0.000000e+00> : vector<8x64xf32>
    %263 = tpu.matmul %261, %262, %cst_41 {dimension_numbers = #tpu.dot_dimension_numbers<[1], [0], [0], [1], [0, 0, 1, 1], [], []>} : vector<8x8xf32>, vector<8x64xf32>, vector<8x64xf32> -> vector<8x64xf32>
    %264 = vector.extract_strided_slice %254 {offsets = [0, 0], sizes = [8, 64], strides = [1, 1]} : vector<8x128xf32> to vector<8x64xf32>
    %265 = tpu.concatenate %264, %263 in 1 : vector<8x64xf32>, vector<8x64xf32> -> vector<8x128xf32>
    %c0_42 = arith.constant 0 : index
    %c0_43 = arith.constant 0 : index
    %266 = vector.load %arg12[%c0_42, %c0_43] : memref<128x64xf32, #tpu.memory_space<vmem>>, vector<128x64xf32>
    %cst_44 = arith.constant dense<0.000000e+00> : vector<8x64xf32>
    %267 = tpu.matmul %265, %266, %cst_44 {dimension_numbers = #tpu.dot_dimension_numbers<[1], [0], [0], [1], [0, 0, 1, 1], [], []>} : vector<8x128xf32>, vector<128x64xf32>, vector<8x64xf32> -> vector<8x64xf32>
    %c0_45 = arith.constant 0 : index
    %c0_46 = arith.constant 0 : index
    %268 = vector.load %arg2[%c0_45, %c0_46] : memref<8x64xf32, #tpu.memory_space<vmem>>, vector<8x64xf32>
    %269 = arith.addf %267, %268 : vector<8x64xf32>
    %c0_47 = arith.constant 0 : index
    %c0_48 = arith.constant 0 : index
    %270 = vector.load %arg13[%c0_47, %c0_48] : memref<8x64xf32, #tpu.memory_space<vmem>>, vector<8x64xf32>
    tpu.vector_store %arg13[%c0_47, %c0_48], %269 {strides = array<i32>} : memref<8x64xf32, #tpu.memory_space<vmem>>, vector<8x64xf32>,
    return
  }
  func.func @transform_0(%arg0: i32) -> (i32, i32) {
    %c0_i32 = arith.constant 0 : i32
    %c0_i32_0 = arith.constant 0 : i32
    %c0_i32_1 = arith.constant 0 : i32
    return %c0_i32, %c0_i32_0 : i32, i32
  }
  func.func @transform_1(%arg0: i32) -> (i32, i32) {
    %c0_i32 = arith.constant 0 : i32
    %c0_i32_0 = arith.constant 0 : i32
    %c0_i32_1 = arith.constant 0 : i32
    return %c0_i32, %c0_i32_0 : i32, i32
  }
  func.func @transform_2(%arg0: i32) -> (i32, i32) {
    %c0_i32 = arith.constant 0 : i32
    %c0_i32_0 = arith.constant 0 : i32
    %c0_i32_1 = arith.constant 0 : i32
    return %c0_i32, %c0_i32_0 : i32, i32
  }
  func.func @transform_3(%arg0: i32) -> (i32, i32) {
    %c0_i32 = arith.constant 0 : i32
    %c0_i32_0 = arith.constant 0 : i32
    %c0_i32_1 = arith.constant 0 : i32
    return %c0_i32, %c0_i32_0 : i32, i32
  }
  func.func @transform_4(%arg0: i32) -> (i32, i32) {
    %c0_i32 = arith.constant 0 : i32
    %c0_i32_0 = arith.constant 0 : i32
    %c0_i32_1 = arith.constant 0 : i32
    return %c0_i32, %c0_i32_0 : i32, i32
  }
  func.func @transform_5(%arg0: i32) -> (i32, i32) {
    %c0_i32 = arith.constant 0 : i32
    %c0_i32_0 = arith.constant 0 : i32
    %c0_i32_1 = arith.constant 0 : i32
    return %c0_i32, %c0_i32_0 : i32, i32
  }
  func.func @transform_6(%arg0: i32) -> (i32, i32) {
    %c0_i32 = arith.constant 0 : i32
    %c0_i32_0 = arith.constant 0 : i32
    %c0_i32_1 = arith.constant 0 : i32
    return %c0_i32, %c0_i32_0 : i32, i32
  }
  func.func @transform_7(%arg0: i32) -> (i32, i32) {
    %c0_i32 = arith.constant 0 : i32
    %c0_i32_0 = arith.constant 0 : i32
    %c0_i32_1 = arith.constant 0 : i32
    return %c0_i32, %c0_i32_0 : i32, i32
  }
  func.func @transform_8(%arg0: i32) -> (i32, i32) {
    %c0_i32 = arith.constant 0 : i32
    %c0_i32_0 = arith.constant 0 : i32
    %c0_i32_1 = arith.constant 0 : i32
    return %c0_i32, %c0_i32_0 : i32, i32
  }
  func.func @transform_9(%arg0: i32) -> (i32, i32) {
    %c0_i32 = arith.constant 0 : i32
    %c0_i32_0 = arith.constant 0 : i32
    %c0_i32_1 = arith.constant 0 : i32
    return %c0_i32, %c0_i32_0 : i32, i32
  }
  func.func @transform_10(%arg0: i32) -> (i32, i32) {
    %c0_i32 = arith.constant 0 : i32
    %c0_i32_0 = arith.constant 0 : i32
    %c0_i32_1 = arith.constant 0 : i32
    return %c0_i32, %c0_i32_0 : i32, i32
  }
  func.func @transform_11(%arg0: i32) -> (i32, i32) {
    %c0_i32 = arith.constant 0 : i32
    %c0_i32_0 = arith.constant 0 : i32
    %c0_i32_1 = arith.constant 0 : i32
    return %c0_i32, %c0_i32_0 : i32, i32
  }
  func.func @transform_12(%arg0: i32) -> (i32, i32) {
    %c0_i32 = arith.constant 0 : i32
    %c0_i32_0 = arith.constant 0 : i32
    %c0_i32_1 = arith.constant 0 : i32
    return %c0_i32, %c0_i32_0 : i32, i32
  }
}

</mosaic_0001>

<llo_original>
// kernel: tpu_custom_call.1
$region0: #{tpu_custom_call.1}
  #allocation0 [shape = 'u32[]', space=smem, size = 0x4, offset = 0x4, fixed_abs, tag = 'smem constant byte address 0x4 - core index']
  #allocation1 [shape = 'u32[144,128]{1,0:T(1,128)}', space=vmem, size = 0x12000, scoped, tag = 'internal scratch']
  %s0 = inlined_call_operand.vmem [shape: f32[32,32], index: 0, kind: input, shape index: {}]
  %s1 = inlined_call_operand.vmem [shape: f32[8,64], index: 1, kind: input, shape index: {}]
  %s2 = inlined_call_operand.vmem [shape: f32[1,32], index: 2, kind: input, shape index: {}]
  %s3 = inlined_call_operand.vmem [shape: f32[1,32], index: 3, kind: input, shape index: {}]
  %s4 = inlined_call_operand.vmem [shape: f32[128,256], index: 4, kind: input, shape index: {}]
  %s5 = inlined_call_operand.vmem [shape: f32[4,128], index: 5, kind: input, shape index: {}]
  %s6 = inlined_call_operand.vmem [shape: f32[1,128], index: 6, kind: input, shape index: {}]
  %s7 = inlined_call_operand.vmem [shape: f32[128,192], index: 7, kind: input, shape index: {}]
  %s8 = inlined_call_operand.vmem [shape: f32[1,128], index: 8, kind: input, shape index: {}]
  %s9 = inlined_call_operand.vmem [shape: f32[8,128], index: 9, kind: input, shape index: {}]
  %s10 = inlined_call_operand.vmem [shape: f32[1,128], index: 10, kind: input, shape index: {}]
  %s11 = inlined_call_operand.vmem [shape: f32[128,64], index: 11, kind: input, shape index: {}]
  %s12 = inlined_call_operand.hbm [shape: f32[8,64], index: 12, kind: output, shape index: {}]
  %s13 = sld [smem:[#allocation0]]
  $region58: #{tpu_custom_call.1} parent=0
    _
  %s15 = ssub.s32 1, %s13
  %s16 = scalar_select 0, %s15, %s13
  $region1: #{tpu_custom_call.1} parent=0
    #allocation2 [shape = 'u8[4096]{0}', space=vmem, size = 0x1000, scoped, tag = 'output window, operand 0, single buffered']
    #allocation3 [shape = 's32[1]{0}', space=sflag, size = 0x4, scoped, tag = 'scoped memory for tpu_custom_call.1']
    %17 = vsyncpa [#allocation3], 0
    // Predicated region
    $region2: #{tpu_custom_call.1} parent=1 // pred_check
      _
    $region3: #{tpu_custom_call.1} parent=1 // pred_check_branch
      %19 = sbr.rel (0) target = $region5
    $region4: #{tpu_custom_call.1} parent=1 // pred_region
      _
    $region5: #{tpu_custom_call.1} parent=1 // pred_fallthru
      _
    // Predicated region
    $region6: #{tpu_custom_call.1} parent=1 // pred_check
      _
    $region7: #{tpu_custom_call.1} parent=1 // pred_check_branch
      %21 = sbr.rel (0) target = $region9
    $region8: #{tpu_custom_call.1} parent=1 // pred_region
      _
    $region9: #{tpu_custom_call.1} parent=1 // pred_fallthru
      _
    // Predicated region
    $region10: #{tpu_custom_call.1} parent=1 // pred_check
      _
    $region11: #{tpu_custom_call.1} parent=1 // pred_check_branch
      %23 = sbr.rel (0) target = $region13
    $region12: #{tpu_custom_call.1} parent=1 // pred_region
      _
    $region13: #{tpu_custom_call.1} parent=1 // pred_fallthru
      _
    // Predicated region
    $region14: #{tpu_custom_call.1} parent=1 // pred_check
      _
    $region15: #{tpu_custom_call.1} parent=1 // pred_check_branch
      %25 = sbr.rel (0) target = $region17
    $region16: #{tpu_custom_call.1} parent=1 // pred_region
      _
    $region17: #{tpu_custom_call.1} parent=1 // pred_fallthru
      _
    // Predicated region
    $region18: #{tpu_custom_call.1} parent=1 // pred_check
      _
    $region19: #{tpu_custom_call.1} parent=1 // pred_check_branch
      %27 = sbr.rel (0) target = $region21
    $region20: #{tpu_custom_call.1} parent=1 // pred_region
      _
    $region21: #{tpu_custom_call.1} parent=1 // pred_fallthru
      _
    // Predicated region
    $region22: #{tpu_custom_call.1} parent=1 // pred_check
      _
    $region23: #{tpu_custom_call.1} parent=1 // pred_check_branch
      %29 = sbr.rel (0) target = $region25
    $region24: #{tpu_custom_call.1} parent=1 // pred_region
      _
    $region25: #{tpu_custom_call.1} parent=1 // pred_fallthru
      _
    // Predicated region
    $region26: #{tpu_custom_call.1} parent=1 // pred_check
      _
    $region27: #{tpu_custom_call.1} parent=1 // pred_check_branch
      %31 = sbr.rel (0) target = $region29
    $region28: #{tpu_custom_call.1} parent=1 // pred_region
      _
    $region29: #{tpu_custom_call.1} parent=1 // pred_fallthru
      _
    // Predicated region
    $region30: #{tpu_custom_call.1} parent=1 // pred_check
      _
    $region31: #{tpu_custom_call.1} parent=1 // pred_check_branch
      %33 = sbr.rel (0) target = $region33
    $region32: #{tpu_custom_call.1} parent=1 // pred_region
      _
    $region33: #{tpu_custom_call.1} parent=1 // pred_fallthru
      _
    // Predicated region
    $region34: #{tpu_custom_call.1} parent=1 // pred_check
      _
    $region35: #{tpu_custom_call.1} parent=1 // pred_check_branch
      %35 = sbr.rel (0) target = $region37
    $region36: #{tpu_custom_call.1} parent=1 // pred_region
      _
    $region37: #{tpu_custom_call.1} parent=1 // pred_fallthru
      _
    // Predicated region
    $region38: #{tpu_custom_call.1} parent=1 // pred_check
      _
    $region39: #{tpu_custom_call.1} parent=1 // pred_check_branch
      %37 = sbr.rel (0) target = $region41
    $region40: #{tpu_custom_call.1} parent=1 // pred_region
      _
    $region41: #{tpu_custom_call.1} parent=1 // pred_fallthru
      _
    // Predicated region
    $region42: #{tpu_custom_call.1} parent=1 // pred_check
      _
    $region43: #{tpu_custom_call.1} parent=1 // pred_check_branch
      %39 = sbr.rel (0) target = $region45
    $region44: #{tpu_custom_call.1} parent=1 // pred_region
      _
    $region45: #{tpu_custom_call.1} parent=1 // pred_fallthru
      _
    // Predicated region
    $region46: #{tpu_custom_call.1} parent=1 // pred_check
      _
    $region47: #{tpu_custom_call.1} parent=1 // pred_check_branch
      %41 = sbr.rel (0) target = $region49
    $region48: #{tpu_custom_call.1} parent=1 // pred_region
      _
    $region49: #{tpu_custom_call.1} parent=1 // pred_fallthru
      _
    %v42 = vld [vmem:[%s0] sm:$0xff]
    %v43 = vld [vmem:[%s0 + $0x8] sm:$0xff]
    %v44 = vld [vmem:[%s0 + $0x10] sm:$0xff]
    %v45 = vld [vmem:[%s0 + $0x18] sm:$0xff]
    %vm46 = vcmask 261120
    %v47 = vsel %vm46, %v42, 0.0
    %48 = vadd.xlane.f32.xlu0 %v47
    %v49 = vpop.xlane.xlu0 %48
    %v50 = vsel %vm46, %v43, 0.0
    %51 = vadd.xlane.f32.xlu0 %v50
    %v52 = vpop.xlane.xlu0 %51
    %v53 = vsel %vm46, %v44, 0.0
    %54 = vadd.xlane.f32.xlu0 %v53
    %v55 = vpop.xlane.xlu0 %54
    %v56 = vsel %vm46, %v45, 0.0
    %57 = vadd.xlane.f32.xlu0 %v56
    %v58 = vpop.xlane.xlu0 %57
    %v59 = vrcp.pop 32.0
    %v60 = vmul.f32 %v49, %v59
    %v61 = vmul.f32 %v52, %v59
    %v62 = vmul.f32 %v55, %v59
    %v63 = vmul.f32 %v58, %v59
    %v64 = vsub.f32 %v42, %v60
    %v65 = vsub.f32 %v43, %v61
    %v66 = vsub.f32 %v44, %v62
    %v67 = vsub.f32 %v45, %v63
    %v68 = vmul.f32 %v64, %v64
    %v69 = vmul.f32 %v65, %v65
    %v70 = vmul.f32 %v66, %v66
    %v71 = vmul.f32 %v67, %v67
    %v72 = vsel %vm46, %v68, 0.0
    %73 = vadd.xlane.f32.xlu0 %v72
    %v74 = vpop.xlane.xlu0 %73
    %v75 = vsel %vm46, %v69, 0.0
    %76 = vadd.xlane.f32.xlu0 %v75
    %v77 = vpop.xlane.xlu0 %76
    %v78 = vsel %vm46, %v70, 0.0
    %79 = vadd.xlane.f32.xlu0 %v78
    %v80 = vpop.xlane.xlu0 %79
    %v81 = vsel %vm46, %v71, 0.0
    %82 = vadd.xlane.f32.xlu0 %v81
    %v83 = vpop.xlane.xlu0 %82
    %v84 = vmul.f32 %v74, %v59
    %v85 = vmul.f32 %v77, %v59
    %v86 = vmul.f32 %v80, %v59
    %v87 = vmul.f32 %v83, %v59
    %v88 = vadd.f32 %v84, 1e-05
    %v89 = vadd.f32 %v85, 1e-05
    %v90 = vadd.f32 %v86, 1e-05
    %v91 = vadd.f32 %v87, 1e-05
    %v92 = vrsqrt.pop %v88
    %v93 = vrsqrt.pop %v89
    %v94 = vrsqrt.pop %v90
    %v95 = vrsqrt.pop %v91
    %v96 = vmul.f32 %v64, %v92
    %v97 = vmul.f32 %v65, %v93
    %v98 = vmul.f32 %v66, %v94
    %v99 = vmul.f32 %v67, %v95
    %v100 = vld [vmem:[%s2] sm:$0x1]
    %v102 = vlaneseq
    %v103 = vshrl.u32 %v102, 7
    %v104 = vsub.s32 0, %v103
    %v105 = vrot.slane %v100, %v104
    %v107 = vmul.f32 %v96, %v105
    %v108 = vmul.f32 %v97, %v105
    %v109 = vmul.f32 %v98, %v105
    %v110 = vmul.f32 %v99, %v105
    %v111 = vld [vmem:[%s3] sm:$0x1]
    %v113 = vlaneseq
    %v114 = vshrl.u32 %v113, 7
    %v115 = vsub.s32 0, %v114
    %v116 = vrot.slane %v111, %v115
    %v118 = vadd.f32 %v107, %v116
    %v119 = vadd.f32 %v108, %v116
    %v120 = vadd.f32 %v109, %v116
    %v121 = vadd.f32 %v110, %v116
    %123 = vrot.lane.b32.xlu0 %v119, 32
    %v124 = vpop.permute.xlu0 %123
    %127 = vrot.lane.b32.xlu0 %v120, 64
    %v128 = vpop.permute.xlu0 %127
    %131 = vrot.lane.b32.xlu0 %v121, 96
    %v132 = vpop.permute.xlu0 %131
    %v134 = vsel %vm46, %v118, %v124
    %vm135 = vcmask 523264
    %v136 = vsel %vm135, %v134, %v128
    %vm137 = vcmask 785408
    %v138 = vsel %vm137, %v136, %v132
    %v139 = vld [vmem:[%s4] sm:$0xff]
    %v140 = vld [vmem:[%s4 + $0x8] sm:$0xff]
    %v141 = vld [vmem:[%s4 + $0x10] sm:$0xff]
    %v142 = vld [vmem:[%s4 + $0x18] sm:$0xff]
    %v143 = vld [vmem:[%s4 + $0x20] sm:$0xff]
    %v144 = vld [vmem:[%s4 + $0x28] sm:$0xff]
    %v145 = vld [vmem:[%s4 + $0x30] sm:$0xff]
    %v146 = vld [vmem:[%s4 + $0x38] sm:$0xff]
    %v147 = vld [vmem:[%s4 + $0x40] sm:$0xff]
    %v148 = vld [vmem:[%s4 + $0x48] sm:$0xff]
    %v149 = vld [vmem:[%s4 + $0x50] sm:$0xff]
    %v150 = vld [vmem:[%s4 + $0x58] sm:$0xff]
    %v151 = vld [vmem:[%s4 + $0x60] sm:$0xff]
    %v152 = vld [vmem:[%s4 + $0x68] sm:$0xff]
    %v153 = vld [vmem:[%s4 + $0x70] sm:$0xff]
    %v154 = vld [vmem:[%s4 + $0x78] sm:$0xff]
    %v155 = vld [vmem:[%s4 + $0x80] sm:$0xff]
    %v156 = vld [vmem:[%s4 + $0x88] sm:$0xff]
    %v157 = vld [vmem:[%s4 + $0x90] sm:$0xff]
    %v158 = vld [vmem:[%s4 + $0x98] sm:$0xff]
    %v159 = vld [vmem:[%s4 + $0xa0] sm:$0xff]
    %v160 = vld [vmem:[%s4 + $0xa8] sm:$0xff]
    %v161 = vld [vmem:[%s4 + $0xb0] sm:$0xff]
    %v162 = vld [vmem:[%s4 + $0xb8] sm:$0xff]
    %v163 = vld [vmem:[%s4 + $0xc0] sm:$0xff]
    %v164 = vld [vmem:[%s4 + $0xc8] sm:$0xff]
    %v165 = vld [vmem:[%s4 + $0xd0] sm:$0xff]
    %v166 = vld [vmem:[%s4 + $0xd8] sm:$0xff]
    %v167 = vld [vmem:[%s4 + $0xe0] sm:$0xff]
    %v168 = vld [vmem:[%s4 + $0xe8] sm:$0xff]
    %v169 = vld [vmem:[%s4 + $0xf0] sm:$0xff]
    %v170 = vld [vmem:[%s4 + $0xf8] sm:$0xff]
    %171 = vmatprep.subr.mxu0 %v170
    %172 = vmatpush1.msra.mxu0 %v169
    %173 = vmatprep.subr.mxu0 %v168
    %174 = vmatpush1.msra.mxu0 %v167
    %175 = vmatprep.subr.mxu0 %v166
    %176 = vmatpush1.msra.mxu0 %v165
    %177 = vmatprep.subr.mxu0 %v164
    %178 = vmatpush1.msra.mxu0 %v163
    %179 = vmatprep.subr.mxu0 %v162
    %180 = vmatpush1.msra.mxu0 %v161
    %181 = vmatprep.subr.mxu0 %v160
    %182 = vmatpush1.msra.mxu0 %v159
    %183 = vmatprep.subr.mxu0 %v158
    %184 = vmatpush1.msra.mxu0 %v157
    %185 = vmatprep.subr.mxu0 %v156
    %186 = vmatpush1.msra.mxu0 %v155
    %187 = vmatprep.subr.mxu0 %v154
    %188 = vmatpush1.msra.mxu0 %v153
    %189 = vmatprep.subr.mxu0 %v152
    %190 = vmatpush1.msra.mxu0 %v151
    %191 = vmatprep.subr.mxu0 %v150
    %192 = vmatpush1.msra.mxu0 %v149
    %193 = vmatprep.subr.mxu0 %v148
    %194 = vmatpush1.msra.mxu0 %v147
    %195 = vmatprep.subr.mxu0 %v146
    %196 = vmatpush1.msra.mxu0 %v145
    %197 = vmatprep.subr.mxu0 %v144
    %198 = vmatpush1.msra.mxu0 %v143
    %199 = vmatprep.subr.mxu0 %v142
    %200 = vmatpush1.msra.mxu0 %v141
    %201 = vmatprep.subr.mxu0 %v140
    %202 = vmatpush1.msra.mxu0 %v139
    %203 = vmatprep.subr.mxu0 0.0
    %204 = vmatpush2.msra.mxu0 0.0
    %205 = vmatprep.subr.mxu0 0.0
    %206 = vmatpush2.msra.mxu0 0.0
    %207 = vmatprep.subr.mxu0 0.0
    %208 = vmatpush2.msra.mxu0 0.0
    %209 = vmatprep.subr.mxu0 0.0
    %210 = vmatpush2.msra.mxu0 0.0
    %211 = vmatprep.subr.mxu0 0.0
    %212 = vmatpush2.msra.mxu0 0.0
    %213 = vmatprep.subr.mxu0 0.0
    %214 = vmatpush2.msra.mxu0 0.0
    %215 = vmatprep.subr.mxu0 0.0
    %216 = vmatpush2.msra.mxu0 0.0
    %217 = vmatprep.subr.mxu0 0.0
    %218 = vmatpush2.msra.mxu0 0.0
    %219 = vmatprep.subr.mxu0 0.0
    %220 = vmatpush2.msra.mxu0 0.0
    %221 = vmatprep.subr.mxu0 0.0
    %222 = vmatpush2.msra.mxu0 0.0
    %223 = vmatprep.subr.mxu0 0.0
    %224 = vmatpush2.msra.mxu0 0.0
    %225 = vmatprep.subr.mxu0 0.0
    %226 = vmatpush2.msra.mxu0 0.0
    %227 = vmatprep.subr.mxu0 0.0
    %228 = vmatpush2.msra.mxu0 0.0
    %229 = vmatprep.subr.mxu0 0.0
    %230 = vmatpush2.msra.mxu0 0.0
    %231 = vmatprep.subr.mxu0 0.0
    %232 = vmatpush2.msra.mxu0 0.0
    %233 = vmatprep.subr.mxu0 0.0
    %234 = vmatpush2.msra.mxu0 0.0
    %235 = vmatprep.mubr.f32.mxu0 0.0
    %236 = vmatmul.mubr.f32.gmra.mxu0 %v138
    %v237 = vpop.f32.mrf.mxu0
    %v238 = vadd.f32 0.0, %v237
    %v239 = vpop.f32.mrf.mxu0
    %v240 = vadd.f32 0.0, %v239
    %241 = vdwg.mxu0
    %v242 = vld [vmem:[%s5] sm:$0xf]
    %v243 = vlaneseq
    %v244 = vshrl.u32 %v243, 7
    %v245 = vsub.s32 3, %v244
    %v246 = vrot.slane %v242, %v245
    %v247 = vmul.f32 %v238, %v246
    %v249 = vrot.slane %v238, 7
    %vm251 = vcmask 1040384
    %v252 = vsel %vm251, 0.0, %v249
    %v253 = vlaneseq
    %v254 = vshrl.u32 %v253, 7
    %v255 = vsub.s32 2, %v254
    %v256 = vrot.slane %v242, %v255
    %v257 = vmul.f32 %v252, %v256
    %v258 = vadd.f32 %v247, %v257
    %v259 = vrot.slane %v238, 6
    %vm261 = vcmask 1041408
    %v262 = vsel %vm261, 0.0, %v259
    %v263 = vlaneseq
    %v264 = vshrl.u32 %v263, 7
    %v265 = vsub.s32 1, %v264
    %v266 = vrot.slane %v242, %v265
    %v267 = vmul.f32 %v262, %v266
    %v268 = vadd.f32 %v258, %v267
    %v269 = vrot.slane %v238, 5
    %vm271 = vcmask 1042432
    %v272 = vsel %vm271, 0.0, %v269
    %v273 = vlaneseq
    %v274 = vshrl.u32 %v273, 7
    %v275 = vsub.s32 0, %v274
    %v276 = vrot.slane %v242, %v275
    %v277 = vmul.f32 %v272, %v276
    %v278 = vadd.f32 %v268, %v277
    %v279 = vld [vmem:[%s6] sm:$0x1]
    %v281 = vlaneseq
    %v282 = vshrl.u32 %v281, 7
    %v283 = vsub.s32 0, %v282
    %v284 = vrot.slane %v279, %v283
    %v286 = vadd.f32 %v278, %v284
    %v287 = vxor.u32 %v286, 2147483648
    %v288 = vmul.f32 %v287, 1.442695
    %v289 = vpow.pop %v288
    %v290 = vadd.f32 %v289, 1.0
    %v291 = vrcp.pop %v290
    %v292 = vmul.f32 1.0, %v291
    %v293 = vmul.f32 %v286, %v292
    %v294 = vld [vmem:[%s7] sm:$0xff]
    %v295 = vld [vmem:[%s7 + $0x8] sm:$0xff]
    %v296 = vld [vmem:[%s7 + $0x10] sm:$0xff]
    %v297 = vld [vmem:[%s7 + $0x18] sm:$0xff]
    %v298 = vld [vmem:[%s7 + $0x20] sm:$0xff]
    %v299 = vld [vmem:[%s7 + $0x28] sm:$0xff]
    %v300 = vld [vmem:[%s7 + $0x30] sm:$0xff]
    %v301 = vld [vmem:[%s7 + $0x38] sm:$0xff]
    %v302 = vld [vmem:[%s7 + $0x40] sm:$0xff]
    %v303 = vld [vmem:[%s7 + $0x48] sm:$0xff]
    %v304 = vld [vmem:[%s7 + $0x50] sm:$0xff]
    %v305 = vld [vmem:[%s7 + $0x58] sm:$0xff]
    %v306 = vld [vmem:[%s7 + $0x60] sm:$0xff]
    %v307 = vld [vmem:[%s7 + $0x68] sm:$0xff]
    %v308 = vld [vmem:[%s7 + $0x70] sm:$0xff]
    %v309 = vld [vmem:[%s7 + $0x78] sm:$0xff]
    %v310 = vld [vmem:[%s7 + $0x80] sm:$0xff]
    %v311 = vld [vmem:[%s7 + $0x88] sm:$0xff]
    %v312 = vld [vmem:[%s7 + $0x90] sm:$0xff]
    %v313 = vld [vmem:[%s7 + $0x98] sm:$0xff]
    %v314 = vld [vmem:[%s7 + $0xa0] sm:$0xff]
    %v315 = vld [vmem:[%s7 + $0xa8] sm:$0xff]
    %v316 = vld [vmem:[%s7 + $0xb0] sm:$0xff]
    %v317 = vld [vmem:[%s7 + $0xb8] sm:$0xff]
    %v318 = vld [vmem:[%s7 + $0xc0] sm:$0xff]
    %v319 = vld [vmem:[%s7 + $0xc8] sm:$0xff]
    %v320 = vld [vmem:[%s7 + $0xd0] sm:$0xff]
    %v321 = vld [vmem:[%s7 + $0xd8] sm:$0xff]
    %v322 = vld [vmem:[%s7 + $0xe0] sm:$0xff]
    %v323 = vld [vmem:[%s7 + $0xe8] sm:$0xff]
    %v324 = vld [vmem:[%s7 + $0xf0] sm:$0xff]
    %v325 = vld [vmem:[%s7 + $0xf8] sm:$0xff]
    %326 = vmatprep.subr.mxu0 %v325
    %327 = vmatpush1.msra.mxu0 %v324
    %328 = vmatprep.subr.mxu0 %v323
    %329 = vmatpush1.msra.mxu0 %v322
    %330 = vmatprep.subr.mxu0 %v321
    %331 = vmatpush1.msra.mxu0 %v320
    %332 = vmatprep.subr.mxu0 %v319
    %333 = vmatpush1.msra.mxu0 %v318
    %334 = vmatprep.subr.mxu0 %v317
    %335 = vmatpush1.msra.mxu0 %v316
    %336 = vmatprep.subr.mxu0 %v315
    %337 = vmatpush1.msra.mxu0 %v314
    %338 = vmatprep.subr.mxu0 %v313
    %339 = vmatpush1.msra.mxu0 %v312
    %340 = vmatprep.subr.mxu0 %v311
    %341 = vmatpush1.msra.mxu0 %v310
    %342 = vmatprep.subr.mxu0 %v309
    %343 = vmatpush1.msra.mxu0 %v308
    %344 = vmatprep.subr.mxu0 %v307
    %345 = vmatpush1.msra.mxu0 %v306
    %346 = vmatprep.subr.mxu0 %v305
    %347 = vmatpush1.msra.mxu0 %v304
    %348 = vmatprep.subr.mxu0 %v303
    %349 = vmatpush1.msra.mxu0 %v302
    %350 = vmatprep.subr.mxu0 %v301
    %351 = vmatpush1.msra.mxu0 %v300
    %352 = vmatprep.subr.mxu0 %v299
    %353 = vmatpush1.msra.mxu0 %v298
    %354 = vmatprep.subr.mxu0 %v297
    %355 = vmatpush1.msra.mxu0 %v296
    %356 = vmatprep.subr.mxu0 %v295
    %357 = vmatpush1.msra.mxu0 %v294
    %358 = vmatprep.subr.mxu0 0.0
    %359 = vmatpush2.msra.mxu0 0.0
    %360 = vmatprep.subr.mxu0 0.0
    %361 = vmatpush2.msra.mxu0 0.0
    %362 = vmatprep.subr.mxu0 0.0
    %363 = vmatpush2.msra.mxu0 0.0
    %364 = vmatprep.subr.mxu0 0.0
    %365 = vmatpush2.msra.mxu0 0.0
    %366 = vmatprep.subr.mxu0 0.0
    %367 = vmatpush2.msra.mxu0 0.0
    %368 = vmatprep.subr.mxu0 0.0
    %369 = vmatpush2.msra.mxu0 0.0
    %370 = vmatprep.subr.mxu0 0.0
    %371 = vmatpush2.msra.mxu0 0.0
    %372 = vmatprep.subr.mxu0 0.0
    %373 = vmatpush2.msra.mxu0 0.0
    %374 = vmatprep.subr.mxu0 0.0
    %375 = vmatpush2.msra.mxu0 0.0
    %376 = vmatprep.subr.mxu0 0.0
    %377 = vmatpush2.msra.mxu0 0.0
    %378 = vmatprep.subr.mxu0 0.0
    %379 = vmatpush2.msra.mxu0 0.0
    %380 = vmatprep.subr.mxu0 0.0
    %381 = vmatpush2.msra.mxu0 0.0
    %382 = vmatprep.subr.mxu0 0.0
    %383 = vmatpush2.msra.mxu0 0.0
    %384 = vmatprep.subr.mxu0 0.0
    %385 = vmatpush2.msra.mxu0 0.0
    %386 = vmatprep.subr.mxu0 0.0
    %387 = vmatpush2.msra.mxu0 0.0
    %388 = vmatprep.subr.mxu0 0.0
    %389 = vmatpush2.msra.mxu0 0.0
    %390 = vmatprep.mubr.f32.mxu0 0.0
    %391 = vmatmul.mubr.f32.gmra.mxu0 %v293
    %v392 = vpop.f32.mrf.mxu0
    %v393 = vadd.f32 0.0, %v392
    %v394 = vpop.f32.mrf.mxu0
    %v395 = vadd.f32 0.0, %v394
    %396 = vdwg.mxu0
    %v397 = vld [vmem:[%s8] sm:$0x1]
    %v399 = vlaneseq
    %v400 = vshrl.u32 %v399, 7
    %v401 = vsub.s32 0, %v400
    %v402 = vrot.slane %v397, %v401
    %v404 = vadd.f32 %v393, %v402
    %v405 = vmax.f32 %v404, 0.0
    %vm406 = vcmp.ne.f32.partialorder %v404, %v404
    %v407 = vadd.f32 %v404, 0.0
    %v408 = vand.u32 2147483647, %v404
    %v409 = vsub.f32 0.0, %v408
    %v410 = vmul.f32 %v409, 1.442695
    %v411 = vpow.pop %v410
    %v412 = vadd.f32 %v411, 1.0
    %v413 = vlog2.pop %v412
    %v414 = vmul.f32 %v413, 0.6931472
    %v415 = vmul.f32 -0.5, %v411
    %v416 = vadd.f32 %v415, 1.0
    %v417 = vmul.f32 %v416, %v411
    %v418 = vand.u32 2147483647, %v411
    %vm419 = vcmp.lt.f32.partialorder %v418, 0.0004427343
    %v420 = vsel %vm419, %v417, %v414
    %v421 = vadd.f32 %v405, %v420
    %v422 = vsel %vm406, %v407, %v421
    %v423 = vlaneseq
    %v424 = vshrl.u32 %v423, 7
    %v425 = vsub.s32 0, %v424
    %v426 = vrot.slane %v395, %v425
    %428 = vbcast.lane.b32.xlu0 %v426, 256
    %v429 = vpop.permute.xlu0 %428
    %v430 = vlaneseq
    %v431 = vshrl.u32 %v430, 7
    %v432 = vsub.s32 1, %v431
    %v433 = vrot.slane %v395, %v432
    %435 = vbcast.lane.b32.xlu0 %v433, 256
    %v436 = vpop.permute.xlu0 %435
    %v437 = vlaneseq
    %v438 = vshrl.u32 %v437, 7
    %v439 = vsub.s32 2, %v438
    %v440 = vrot.slane %v395, %v439
    %442 = vbcast.lane.b32.xlu0 %v440, 256
    %v443 = vpop.permute.xlu0 %442
    %v444 = vlaneseq
    %v445 = vshrl.u32 %v444, 7
    %v446 = vsub.s32 3, %v445
    %v447 = vrot.slane %v395, %v446
    %449 = vbcast.lane.b32.xlu0 %v447, 256
    %v450 = vpop.permute.xlu0 %449
    %v451 = vlaneseq
    %v452 = vshrl.u32 %v451, 7
    %v453 = vsub.s32 4, %v452
    %v454 = vrot.slane %v395, %v453
    %456 = vbcast.lane.b32.xlu0 %v454, 256
    %v457 = vpop.permute.xlu0 %456
    %v458 = vlaneseq
    %v459 = vshrl.u32 %v458, 7
    %v460 = vsub.s32 5, %v459
    %v461 = vrot.slane %v395, %v460
    %463 = vbcast.lane.b32.xlu0 %v461, 256
    %v464 = vpop.permute.xlu0 %463
    %v465 = vlaneseq
    %v466 = vshrl.u32 %v465, 7
    %v467 = vsub.s32 6, %v466
    %v468 = vrot.slane %v395, %v467
    %470 = vbcast.lane.b32.xlu0 %v468, 256
    %v471 = vpop.permute.xlu0 %470
    %v472 = vlaneseq
    %v473 = vshrl.u32 %v472, 7
    %v474 = vsub.s32 7, %v473
    %v475 = vrot.slane %v395, %v474
    %477 = vbcast.lane.b32.xlu0 %v475, 256
    %v478 = vpop.permute.xlu0 %477
    %s480 = sor.u32 256, 8
    %481 = vbcast.lane.b32.xlu0 %v426, %s480
    %v482 = vpop.permute.xlu0 %481
    %s484 = sor.u32 256, 8
    %485 = vbcast.lane.b32.xlu0 %v433, %s484
    %v486 = vpop.permute.xlu0 %485
    %s488 = sor.u32 256, 8
    %489 = vbcast.lane.b32.xlu0 %v440, %s488
    %v490 = vpop.permute.xlu0 %489
    %s492 = sor.u32 256, 8
    %493 = vbcast.lane.b32.xlu0 %v447, %s492
    %v494 = vpop.permute.xlu0 %493
    %s496 = sor.u32 256, 8
    %497 = vbcast.lane.b32.xlu0 %v454, %s496
    %v498 = vpop.permute.xlu0 %497
    %s500 = sor.u32 256, 8
    %501 = vbcast.lane.b32.xlu0 %v461, %s500
    %v502 = vpop.permute.xlu0 %501
    %s504 = sor.u32 256, 8
    %505 = vbcast.lane.b32.xlu0 %v468, %s504
    %v506 = vpop.permute.xlu0 %505
    %s508 = sor.u32 256, 8
    %509 = vbcast.lane.b32.xlu0 %v475, %s508
    %v510 = vpop.permute.xlu0 %509
    %s512 = sor.u32 256, 16
    %513 = vbcast.lane.b32.xlu0 %v426, %s512
    %v514 = vpop.permute.xlu0 %513
    %s516 = sor.u32 256, 16
    %517 = vbcast.lane.b32.xlu0 %v433, %s516
    %v518 = vpop.permute.xlu0 %517
    %s520 = sor.u32 256, 16
    %521 = vbcast.lane.b32.xlu0 %v440, %s520
    %v522 = vpop.permute.xlu0 %521
    %s524 = sor.u32 256, 16
    %525 = vbcast.lane.b32.xlu0 %v447, %s524
    %v526 = vpop.permute.xlu0 %525
    %s528 = sor.u32 256, 16
    %529 = vbcast.lane.b32.xlu0 %v454, %s528
    %v530 = vpop.permute.xlu0 %529
    %s532 = sor.u32 256, 16
    %533 = vbcast.lane.b32.xlu0 %v461, %s532
    %v534 = vpop.permute.xlu0 %533
    %s536 = sor.u32 256, 16
    %537 = vbcast.lane.b32.xlu0 %v468, %s536
    %v538 = vpop.permute.xlu0 %537
    %s540 = sor.u32 256, 16
    %541 = vbcast.lane.b32.xlu0 %v475, %s540
    %v542 = vpop.permute.xlu0 %541
    %s544 = sor.u32 256, 24
    %545 = vbcast.lane.b32.xlu0 %v426, %s544
    %v546 = vpop.permute.xlu0 %545
    %s548 = sor.u32 256, 24
    %549 = vbcast.lane.b32.xlu0 %v433, %s548
    %v550 = vpop.permute.xlu0 %549
    %s552 = sor.u32 256, 24
    %553 = vbcast.lane.b32.xlu0 %v440, %s552
    %v554 = vpop.permute.xlu0 %553
    %s556 = sor.u32 256, 24
    %557 = vbcast.lane.b32.xlu0 %v447, %s556
    %v558 = vpop.permute.xlu0 %557
    %s560 = sor.u32 256, 24
    %561 = vbcast.lane.b32.xlu0 %v454, %s560
    %v562 = vpop.permute.xlu0 %561
    %s564 = sor.u32 256, 24
    %565 = vbcast.lane.b32.xlu0 %v461, %s564
    %v566 = vpop.permute.xlu0 %565
    %s568 = sor.u32 256, 24
    %569 = vbcast.lane.b32.xlu0 %v468, %s568
    %v570 = vpop.permute.xlu0 %569
    %s572 = sor.u32 256, 24
    %573 = vbcast.lane.b32.xlu0 %v475, %s572
    %v574 = vpop.permute.xlu0 %573
    %v575 = vsel %vm46, %v429, %v482
    %v576 = vsel %vm46, %v436, %v486
    %v577 = vsel %vm46, %v443, %v490
    %v578 = vsel %vm46, %v450, %v494
    %v579 = vsel %vm46, %v457, %v498
    %v580 = vsel %vm46, %v464, %v502
    %v581 = vsel %vm46, %v471, %v506
    %v582 = vsel %vm46, %v478, %v510
    %v583 = vsel %vm135, %v575, %v514
    %v584 = vsel %vm135, %v576, %v518
    %v585 = vsel %vm135, %v577, %v522
    %v586 = vsel %vm135, %v578, %v526
    %v587 = vsel %vm135, %v579, %v530
    %v588 = vsel %vm135, %v580, %v534
    %v589 = vsel %vm135, %v581, %v538
    %v590 = vsel %vm135, %v582, %v542
    %v591 = vsel %vm137, %v583, %v546
    %v592 = vsel %vm137, %v584, %v550
    %v593 = vsel %vm137, %v585, %v554
    %v594 = vsel %vm137, %v586, %v558
    %v595 = vsel %vm137, %v587, %v562
    %v596 = vsel %vm137, %v588, %v566
    %v597 = vsel %vm137, %v589, %v570
    %v598 = vsel %vm137, %v590, %v574
    %s600 = sor.u32 256, 32
    %601 = vbcast.lane.b32.xlu0 %v426, %s600
    %v602 = vpop.permute.xlu0 %601
    %s604 = sor.u32 256, 32
    %605 = vbcast.lane.b32.xlu0 %v433, %s604
    %v606 = vpop.permute.xlu0 %605
    %s608 = sor.u32 256, 32
    %609 = vbcast.lane.b32.xlu0 %v440, %s608
    %v610 = vpop.permute.xlu0 %609
    %s612 = sor.u32 256, 32
    %613 = vbcast.lane.b32.xlu0 %v447, %s612
    %v614 = vpop.permute.xlu0 %613
    %s616 = sor.u32 256, 32
    %617 = vbcast.lane.b32.xlu0 %v454, %s616
    %v618 = vpop.permute.xlu0 %617
    %s620 = sor.u32 256, 32
    %621 = vbcast.lane.b32.xlu0 %v461, %s620
    %v622 = vpop.permute.xlu0 %621
    %s624 = sor.u32 256, 32
    %625 = vbcast.lane.b32.xlu0 %v468, %s624
    %v626 = vpop.permute.xlu0 %625
    %s628 = sor.u32 256, 32
    %629 = vbcast.lane.b32.xlu0 %v475, %s628
    %v630 = vpop.permute.xlu0 %629
    %s632 = sor.u32 256, 40
    %633 = vbcast.lane.b32.xlu0 %v426, %s632
    %v634 = vpop.permute.xlu0 %633
    %s636 = sor.u32 256, 40
    %637 = vbcast.lane.b32.xlu0 %v433, %s636
    %v638 = vpop.permute.xlu0 %637
    %s640 = sor.u32 256, 40
    %641 = vbcast.lane.b32.xlu0 %v440, %s640
    %v642 = vpop.permute.xlu0 %641
    %s644 = sor.u32 256, 40
    %645 = vbcast.lane.b32.xlu0 %v447, %s644
    %v646 = vpop.permute.xlu0 %645
    %s648 = sor.u32 256, 40
    %649 = vbcast.lane.b32.xlu0 %v454, %s648
    %v650 = vpop.permute.xlu0 %649
    %s652 = sor.u32 256, 40
    %653 = vbcast.lane.b32.xlu0 %v461, %s652
    %v654 = vpop.permute.xlu0 %653
    %s656 = sor.u32 256, 40
    %657 = vbcast.lane.b32.xlu0 %v468, %s656
    %v658 = vpop.permute.xlu0 %657
    %s660 = sor.u32 256, 40
    %661 = vbcast.lane.b32.xlu0 %v475, %s660
    %v662 = vpop.permute.xlu0 %661
    %s664 = sor.u32 256, 48
    %665 = vbcast.lane.b32.xlu0 %v426, %s664
    %v666 = vpop.permute.xlu0 %665
    %s668 = sor.u32 256, 48
    %669 = vbcast.lane.b32.xlu0 %v433, %s668
    %v670 = vpop.permute.xlu0 %669
    %s672 = sor.u32 256, 48
    %673 = vbcast.lane.b32.xlu0 %v440, %s672
    %v674 = vpop.permute.xlu0 %673
    %s676 = sor.u32 256, 48
    %677 = vbcast.lane.b32.xlu0 %v447, %s676
    %v678 = vpop.permute.xlu0 %677
    %s680 = sor.u32 256, 48
    %681 = vbcast.lane.b32.xlu0 %v454, %s680
    %v682 = vpop.permute.xlu0 %681
    %s684 = sor.u32 256, 48
    %685 = vbcast.lane.b32.xlu0 %v461, %s684
    %v686 = vpop.permute.xlu0 %685
    %s688 = sor.u32 256, 48
    %689 = vbcast.lane.b32.xlu0 %v468, %s688
    %v690 = vpop.permute.xlu0 %689
    %s692 = sor.u32 256, 48
    %693 = vbcast.lane.b32.xlu0 %v475, %s692
    %v694 = vpop.permute.xlu0 %693
    %s696 = sor.u32 256, 56
    %697 = vbcast.lane.b32.xlu0 %v426, %s696
    %v698 = vpop.permute.xlu0 %697
    %s700 = sor.u32 256, 56
    %701 = vbcast.lane.b32.xlu0 %v433, %s700
    %v702 = vpop.permute.xlu0 %701
    %s704 = sor.u32 256, 56
    %705 = vbcast.lane.b32.xlu0 %v440, %s704
    %v706 = vpop.permute.xlu0 %705
    %s708 = sor.u32 256, 56
    %709 = vbcast.lane.b32.xlu0 %v447, %s708
    %v710 = vpop.permute.xlu0 %709
    %s712 = sor.u32 256, 56
    %713 = vbcast.lane.b32.xlu0 %v454, %s712
    %v714 = vpop.permute.xlu0 %713
    %s716 = sor.u32 256, 56
    %717 = vbcast.lane.b32.xlu0 %v461, %s716
    %v718 = vpop.permute.xlu0 %717
    %s720 = sor.u32 256, 56
    %721 = vbcast.lane.b32.xlu0 %v468, %s720
    %v722 = vpop.permute.xlu0 %721
    %s724 = sor.u32 256, 56
    %725 = vbcast.lane.b32.xlu0 %v475, %s724
    %v726 = vpop.permute.xlu0 %725
    %v727 = vsel %vm46, %v602, %v634
    %v728 = vsel %vm46, %v606, %v638
    %v729 = vsel %vm46, %v610, %v642
    %v730 = vsel %vm46, %v614, %v646
    %v731 = vsel %vm46, %v618, %v650
    %v732 = vsel %vm46, %v622, %v654
    %v733 = vsel %vm46, %v626, %v658
    %v734 = vsel %vm46, %v630, %v662
    %v735 = vsel %vm135, %v727, %v666
    %v736 = vsel %vm135, %v728, %v670
    %v737 = vsel %vm135, %v729, %v674
    %v738 = vsel %vm135, %v730, %v678
    %v739 = vsel %vm135, %v731, %v682
    %v740 = vsel %vm135, %v732, %v686
    %v741 = vsel %vm135, %v733, %v690
    %v742 = vsel %vm135, %v734, %v694
    %v743 = vsel %vm137, %v735, %v698
    %v744 = vsel %vm137, %v736, %v702
    %v745 = vsel %vm137, %v737, %v706
    %v746 = vsel %vm137, %v738, %v710
    %v747 = vsel %vm137, %v739, %v714
    %v748 = vsel %vm137, %v740, %v718
    %v749 = vsel %vm137, %v741, %v722
    %v750 = vsel %vm137, %v742, %v726
    %v752 = vcombine.high %v422, %v422
    %v754 = vunpack.c.l.s4 1966171168
    %v755 = vunpack.c.0.s8 %v754
    %v756 = vlaneseq
    %v757 = vshrl.u32 %v756, 7
    %v758 = vsub.s32 %v755, %v757
    %v759 = vrot.slane %v422, %v758
    %v761 = vunpack.c.l.s4 1966171168
    %v762 = vunpack.c.0.s8 %v761
    %v763 = vlaneseq
    %v764 = vshrl.u32 %v763, 7
    %v765 = vsub.s32 %v762, %v764
    %v766 = vrot.slane %v752, %v765
    %v767 = vcombine.high %v759, %v759
    %v768 = vcombine.high %v766, %v766
    %v770 = vunpack.c.l.s4 1966171168
    %v771 = vunpack.c.0.s8 %v770
    %v772 = vlaneseq
    %v773 = vshrl.u32 %v772, 7
    %v774 = vsub.s32 %v771, %v773
    %v775 = vrot.slane %v759, %v774
    %v777 = vunpack.c.l.s4 1966171168
    %v778 = vunpack.c.0.s8 %v777
    %v779 = vlaneseq
    %v780 = vshrl.u32 %v779, 7
    %v781 = vsub.s32 %v778, %v780
    %v782 = vrot.slane %v766, %v781
    %v784 = vunpack.c.l.s4 1966171168
    %v785 = vunpack.c.0.s8 %v784
    %v786 = vlaneseq
    %v787 = vshrl.u32 %v786, 7
    %v788 = vsub.s32 %v785, %v787
    %v789 = vrot.slane %v767, %v788
    %v791 = vunpack.c.l.s4 1966171168
    %v792 = vunpack.c.0.s8 %v791
    %v793 = vlaneseq
    %v794 = vshrl.u32 %v793, 7
    %v795 = vsub.s32 %v792, %v794
    %v796 = vrot.slane %v768, %v795
    %v797 = vcombine.high %v775, %v775
    %v798 = vcombine.high %v782, %v782
    %v799 = vcombine.high %v789, %v789
    %v800 = vcombine.high %v796, %v796
    %v801 = vld [vmem:[%s9] sm:$0xff]
    %v802 = vlaneseq
    %v803 = vshrl.u32 %v802, 7
    %v804 = vsub.s32 0, %v803
    %v805 = vrot.slane %v775, %v804
    %v806 = vlaneseq
    %v807 = vshrl.u32 %v806, 7
    %v808 = vsub.s32 0, %v807
    %v809 = vrot.slane %v789, %v808
    %v810 = vlaneseq
    %v811 = vshrl.u32 %v810, 7
    %v812 = vsub.s32 0, %v811
    %v813 = vrot.slane %v797, %v812
    %v814 = vlaneseq
    %v815 = vshrl.u32 %v814, 7
    %v816 = vsub.s32 0, %v815
    %v817 = vrot.slane %v799, %v816
    %v818 = vlaneseq
    %v819 = vshrl.u32 %v818, 7
    %v820 = vsub.s32 0, %v819
    %v821 = vrot.slane %v782, %v820
    %v822 = vlaneseq
    %v823 = vshrl.u32 %v822, 7
    %v824 = vsub.s32 0, %v823
    %v825 = vrot.slane %v796, %v824
    %v826 = vlaneseq
    %v827 = vshrl.u32 %v826, 7
    %v828 = vsub.s32 0, %v827
    %v829 = vrot.slane %v798, %v828
    %v830 = vlaneseq
    %v831 = vshrl.u32 %v830, 7
    %v832 = vsub.s32 0, %v831
    %v833 = vrot.slane %v800, %v832
    %v842 = vmul.f32 %v805, %v801
    %v843 = vmul.f32 %v809, %v801
    %v844 = vmul.f32 %v813, %v801
    %v845 = vmul.f32 %v817, %v801
    %v846 = vmul.f32 %v821, %v801
    %v847 = vmul.f32 %v825, %v801
    %v848 = vmul.f32 %v829, %v801
    %v849 = vmul.f32 %v833, %v801
    %v850 = vmul.f32 %v842, 1.442695
    %v851 = vpow.pop %v850
    %v852 = vmul.f32 %v843, 1.442695
    %v853 = vpow.pop %v852
    %v854 = vmul.f32 %v844, 1.442695
    %v855 = vpow.pop %v854
    %v856 = vmul.f32 %v845, 1.442695
    %v857 = vpow.pop %v856
    %v858 = vmul.f32 %v846, 1.442695
    %v859 = vpow.pop %v858
    %v860 = vmul.f32 %v847, 1.442695
    %v861 = vpow.pop %v860
    %v862 = vmul.f32 %v848, 1.442695
    %v863 = vpow.pop %v862
    %v864 = vmul.f32 %v849, 1.442695
    %v865 = vpow.pop %v864
    %v866 = vmul.f32 %v422, %v293
    %v867 = vmul.f32 %v851, 0.0
    %v868 = vlaneseq
    %v869 = vshrl.u32 %v868, 7
    %v870 = vsub.s32 0, %v869
    %v871 = vrot.slane %v866, %v870
    %v872 = vmul.f32 %v871, %v591
    %v873 = vadd.f32 %v867, %v872
    %v874 = vmul.f32 %v873, %v743
    %v875 = vrot.slane %v874, 4
    %v876 = vadd.f32 %v874, %v875
    %v877 = vrot.slane %v876, 2
    %v878 = vadd.f32 %v876, %v877
    %v879 = vrot.slane %v878, 1
    %v880 = vadd.f32 %v878, %v879
    %v881 = vmul.f32 %v853, %v873
    %v882 = vlaneseq
    %v883 = vshrl.u32 %v882, 7
    %v884 = vsub.s32 1, %v883
    %v885 = vrot.slane %v866, %v884
    %v886 = vmul.f32 %v885, %v592
    %v887 = vadd.f32 %v881, %v886
    %v888 = vmul.f32 %v887, %v744
    %v889 = vrot.slane %v888, 4
    %v890 = vadd.f32 %v888, %v889
    %v891 = vrot.slane %v890, 2
    %v892 = vadd.f32 %v890, %v891
    %v893 = vrot.slane %v892, 1
    %v894 = vadd.f32 %v892, %v893
    %v895 = vmul.f32 %v855, %v887
    %v896 = vlaneseq
    %v897 = vshrl.u32 %v896, 7
    %v898 = vsub.s32 2, %v897
    %v899 = vrot.slane %v866, %v898
    %v900 = vmul.f32 %v899, %v593
    %v901 = vadd.f32 %v895, %v900
    %v902 = vmul.f32 %v901, %v745
    %v903 = vrot.slane %v902, 4
    %v904 = vadd.f32 %v902, %v903
    %v905 = vrot.slane %v904, 2
    %v906 = vadd.f32 %v904, %v905
    %v907 = vrot.slane %v906, 1
    %v908 = vadd.f32 %v906, %v907
    %v909 = vmul.f32 %v857, %v901
    %v910 = vlaneseq
    %v911 = vshrl.u32 %v910, 7
    %v912 = vsub.s32 3, %v911
    %v913 = vrot.slane %v866, %v912
    %v914 = vmul.f32 %v913, %v594
    %v915 = vadd.f32 %v909, %v914
    %v916 = vmul.f32 %v915, %v746
    %v917 = vrot.slane %v916, 4
    %v918 = vadd.f32 %v916, %v917
    %v919 = vrot.slane %v918, 2
    %v920 = vadd.f32 %v918, %v919
    %v921 = vrot.slane %v920, 1
    %v922 = vadd.f32 %v920, %v921
    %v923 = vmul.f32 %v859, %v915
    %v924 = vlaneseq
    %v925 = vshrl.u32 %v924, 7
    %v926 = vsub.s32 4, %v925
    %v927 = vrot.slane %v866, %v926
    %v928 = vmul.f32 %v927, %v595
    %v929 = vadd.f32 %v923, %v928
    %v930 = vmul.f32 %v929, %v747
    %v931 = vrot.slane %v930, 4
    %v932 = vadd.f32 %v930, %v931
    %v933 = vrot.slane %v932, 2
    %v934 = vadd.f32 %v932, %v933
    %v935 = vrot.slane %v934, 1
    %v936 = vadd.f32 %v934, %v935
    %v937 = vmul.f32 %v861, %v929
    %v938 = vlaneseq
    %v939 = vshrl.u32 %v938, 7
    %v940 = vsub.s32 5, %v939
    %v941 = vrot.slane %v866, %v940
    %v942 = vmul.f32 %v941, %v596
    %v943 = vadd.f32 %v937, %v942
    %v944 = vmul.f32 %v943, %v748
    %v945 = vrot.slane %v944, 4
    %v946 = vadd.f32 %v944, %v945
    %v947 = vrot.slane %v946, 2
    %v948 = vadd.f32 %v946, %v947
    %v949 = vrot.slane %v948, 1
    %v950 = vadd.f32 %v948, %v949
    %v951 = vmul.f32 %v863, %v943
    %v952 = vlaneseq
    %v953 = vshrl.u32 %v952, 7
    %v954 = vsub.s32 6, %v953
    %v955 = vrot.slane %v866, %v954
    %v956 = vmul.f32 %v955, %v597
    %v957 = vadd.f32 %v951, %v956
    %v958 = vmul.f32 %v957, %v749
    %v959 = vrot.slane %v958, 4
    %v960 = vadd.f32 %v958, %v959
    %v961 = vrot.slane %v960, 2
    %v962 = vadd.f32 %v960, %v961
    %v963 = vrot.slane %v962, 1
    %v964 = vadd.f32 %v962, %v963
    %v965 = vmul.f32 %v865, %v957
    %v966 = vlaneseq
    %v967 = vshrl.u32 %v966, 7
    %v968 = vsub.s32 7, %v967
    %v969 = vrot.slane %v866, %v968
    %v970 = vmul.f32 %v969, %v598
    %v971 = vadd.f32 %v965, %v970
    %v972 = vmul.f32 %v971, %v750
    %v973 = vrot.slane %v972, 4
    %v974 = vadd.f32 %v972, %v973
    %v975 = vrot.slane %v974, 2
    %v976 = vadd.f32 %v974, %v975
    %v977 = vrot.slane %v976, 1
    %v978 = vadd.f32 %v976, %v977
    %v979 = vsel %vm251, %v880, %v894
    %v980 = vsel %vm261, %v979, %v908
    %v981 = vsel %vm271, %v980, %v922
    %vm982 = vcmask 1043456
    %v983 = vsel %vm982, %v981, %v936
    %vm984 = vcmask 1044480
    %v985 = vsel %vm984, %v983, %v950
    %vm986 = vcmask 1045504
    %v987 = vsel %vm986, %v985, %v964
    %vm988 = vcmask 1046528
    %v989 = vsel %vm988, %v987, %v978
    %v990 = vld [vmem:[%s10] sm:$0x1]
    %v992 = vlaneseq
    %v993 = vshrl.u32 %v992, 7
    %v994 = vsub.s32 0, %v993
    %v995 = vrot.slane %v990, %v994
    %v997 = vmul.f32 %v293, %v995
    %v998 = vadd.f32 %v989, %v997
    %v999 = vxor.u32 %v240, 2147483648
    %v1000 = vmul.f32 %v999, 1.442695
    %v1001 = vpow.pop %v1000
    %v1002 = vadd.f32 %v1001, 1.0
    %v1003 = vrcp.pop %v1002
    %v1004 = vmul.f32 1.0, %v1003
    %v1005 = vmul.f32 %v240, %v1004
    %v1006 = vmul.f32 %v998, %v1005
    %v1007 = vlaneseq
    %v1008 = vshrl.u32 %v1007, 7
    %v1009 = vlaneseq
    %v1010 = vand.u32 %v1009, 127
    %v1011 = vadd.s32 %v1008, %v1010
    %vm1012 = vcmp.eq.s32.totalorder %v1011, 7
    %v1013 = vsel %vm1012, 1, 0
    %v1014 = vcvt.s32.f32 %v1013
    %1016 = vrot.lane.b32.xlu0 %v1006, 64
    %v1017 = vpop.permute.xlu0 %1016
    %vm1019 = vcmask 64512
    %v1021 = vsel %vm1019, %v1014, 0
    %1023 = vmatprep.subr.mxu0 0.0
    %1024 = vmatpush1.msra.mxu0 0.0
    %1025 = vmatprep.subr.mxu0 0.0
    %1026 = vmatpush1.msra.mxu0 0.0
    %1027 = vmatprep.subr.mxu0 0.0
    %1028 = vmatpush1.msra.mxu0 0.0
    %1029 = vmatprep.subr.mxu0 0.0
    %1030 = vmatpush1.msra.mxu0 0.0
    %1031 = vmatprep.subr.mxu0 0.0
    %1032 = vmatpush1.msra.mxu0 0.0
    %1033 = vmatprep.subr.mxu0 0.0
    %1034 = vmatpush1.msra.mxu0 0.0
    %1035 = vmatprep.subr.mxu0 0.0
    %1036 = vmatpush1.msra.mxu0 0.0
    %1037 = vmatprep.subr.mxu0 0.0
    %1038 = vmatpush1.msra.mxu0 0.0
    %1039 = vmatprep.subr.mxu0 0.0
    %1040 = vmatpush1.msra.mxu0 0.0
    %1041 = vmatprep.subr.mxu0 0.0
    %1042 = vmatpush1.msra.mxu0 0.0
    %1043 = vmatprep.subr.mxu0 0.0
    %1044 = vmatpush1.msra.mxu0 0.0
    %1045 = vmatprep.subr.mxu0 0.0
    %1046 = vmatpush1.msra.mxu0 0.0
    %1047 = vmatprep.subr.mxu0 0.0
    %1048 = vmatpush1.msra.mxu0 0.0
    %1049 = vmatprep.subr.mxu0 0.0
    %1050 = vmatpush1.msra.mxu0 0.0
    %1051 = vmatprep.subr.mxu0 0.0
    %1052 = vmatpush1.msra.mxu0 0.0
    %1053 = vmatprep.subr.mxu0 0.0
    %1054 = vmatpush1.msra.mxu0 %v1017
    %1055 = vmatprep.subr.mxu0 0.0
    %1056 = vmatpush2.msra.mxu0 0.0
    %1057 = vmatprep.subr.mxu0 0.0
    %1058 = vmatpush2.msra.mxu0 0.0
    %1059 = vmatprep.subr.mxu0 0.0
    %1060 = vmatpush2.msra.mxu0 0.0
    %1061 = vmatprep.subr.mxu0 0.0
    %1062 = vmatpush2.msra.mxu0 0.0
    %1063 = vmatprep.subr.mxu0 0.0
    %1064 = vmatpush2.msra.mxu0 0.0
    %1065 = vmatprep.subr.mxu0 0.0
    %1066 = vmatpush2.msra.mxu0 0.0
    %1067 = vmatprep.subr.mxu0 0.0
    %1068 = vmatpush2.msra.mxu0 0.0
    %1069 = vmatprep.subr.mxu0 0.0
    %1070 = vmatpush2.msra.mxu0 0.0
    %1071 = vmatprep.subr.mxu0 0.0
    %1072 = vmatpush2.msra.mxu0 0.0
    %1073 = vmatprep.subr.mxu0 0.0
    %1074 = vmatpush2.msra.mxu0 0.0
    %1075 = vmatprep.subr.mxu0 0.0
    %1076 = vmatpush2.msra.mxu0 0.0
    %1077 = vmatprep.subr.mxu0 0.0
    %1078 = vmatpush2.msra.mxu0 0.0
    %1079 = vmatprep.subr.mxu0 0.0
    %1080 = vmatpush2.msra.mxu0 0.0
    %1081 = vmatprep.subr.mxu0 0.0
    %1082 = vmatpush2.msra.mxu0 0.0
    %1083 = vmatprep.subr.mxu0 0.0
    %1084 = vmatpush2.msra.mxu0 0.0
    %1085 = vmatprep.subr.mxu0 0.0
    %1086 = vmatpush2.msra.mxu0 0.0
    %1087 = vmatprep.mubr.f32.mxu0 0.0
    %1088 = vmatmul.mubr.f32.gmra.mxu0 %v1021
    %v1089 = vpop.f32.mrf.mxu0
    %v1090 = vadd.f32 0.0, %v1089
    %v1091 = vpop.f32.mrf.mxu0
    %1092 = vdwg.mxu0
    %1094 = vrot.lane.b32.xlu0 %v1090, 64
    %v1095 = vpop.permute.xlu0 %1094
    %v1097 = vsel %vm135, %v1006, %v1095
    %v1098 = vld [vmem:[%s11] sm:$0xff]
    %v1099 = vld [vmem:[%s11 + $0x8] sm:$0xff]
    %v1100 = vld [vmem:[%s11 + $0x10] sm:$0xff]
    %v1101 = vld [vmem:[%s11 + $0x18] sm:$0xff]
    %v1102 = vld [vmem:[%s11 + $0x20] sm:$0xff]
    %v1103 = vld [vmem:[%s11 + $0x28] sm:$0xff]
    %v1104 = vld [vmem:[%s11 + $0x30] sm:$0xff]
    %v1105 = vld [vmem:[%s11 + $0x38] sm:$0xff]
    %v1106 = vld [vmem:[%s11 + $0x40] sm:$0xff]
    %v1107 = vld [vmem:[%s11 + $0x48] sm:$0xff]
    %v1108 = vld [vmem:[%s11 + $0x50] sm:$0xff]
    %v1109 = vld [vmem:[%s11 + $0x58] sm:$0xff]
    %v1110 = vld [vmem:[%s11 + $0x60] sm:$0xff]
    %v1111 = vld [vmem:[%s11 + $0x68] sm:$0xff]
    %v1112 = vld [vmem:[%s11 + $0x70] sm:$0xff]
    %v1113 = vld [vmem:[%s11 + $0x78] sm:$0xff]
    %v1114 = vld [vmem:[%s1] sm:$0xff]
    %1115 = vmatprep.subr.mxu0 0.0
    %1116 = vmatpush1.msra.mxu0 %v1113
    %1117 = vmatprep.subr.mxu0 0.0
    %1118 = vmatpush1.msra.mxu0 %v1112
    %1119 = vmatprep.subr.mxu0 0.0
    %1120 = vmatpush1.msra.mxu0 %v1111
    %1121 = vmatprep.subr.mxu0 0.0
    %1122 = vmatpush1.msra.mxu0 %v1110
    %1123 = vmatprep.subr.mxu0 0.0
    %1124 = vmatpush1.msra.mxu0 %v1109
    %1125 = vmatprep.subr.mxu0 0.0
    %1126 = vmatpush1.msra.mxu0 %v1108
    %1127 = vmatprep.subr.mxu0 0.0
    %1128 = vmatpush1.msra.mxu0 %v1107
    %1129 = vmatprep.subr.mxu0 0.0
    %1130 = vmatpush1.msra.mxu0 %v1106
    %1131 = vmatprep.subr.mxu0 0.0
    %1132 = vmatpush1.msra.mxu0 %v1105
    %1133 = vmatprep.subr.mxu0 0.0
    %1134 = vmatpush1.msra.mxu0 %v1104
    %1135 = vmatprep.subr.mxu0 0.0
    %1136 = vmatpush1.msra.mxu0 %v1103
    %1137 = vmatprep.subr.mxu0 0.0
    %1138 = vmatpush1.msra.mxu0 %v1102
    %1139 = vmatprep.subr.mxu0 0.0
    %1140 = vmatpush1.msra.mxu0 %v1101
    %1141 = vmatprep.subr.mxu0 0.0
    %1142 = vmatpush1.msra.mxu0 %v1100
    %1143 = vmatprep.subr.mxu0 0.0
    %1144 = vmatpush1.msra.mxu0 %v1099
    %1145 = vmatprep.subr.mxu0 0.0
    %1146 = vmatpush1.msra.mxu0 %v1098
    %1147 = vmatprep.subr.mxu0 0.0
    %1148 = vmatpush2.msra.mxu0 0.0
    %1149 = vmatprep.subr.mxu0 0.0
    %1150 = vmatpush2.msra.mxu0 0.0
    %1151 = vmatprep.subr.mxu0 0.0
    %1152 = vmatpush2.msra.mxu0 0.0
    %1153 = vmatprep.subr.mxu0 0.0
    %1154 = vmatpush2.msra.mxu0 0.0
    %1155 = vmatprep.subr.mxu0 0.0
    %1156 = vmatpush2.msra.mxu0 0.0
    %1157 = vmatprep.subr.mxu0 0.0
    %1158 = vmatpush2.msra.mxu0 0.0
    %1159 = vmatprep.subr.mxu0 0.0
    %1160 = vmatpush2.msra.mxu0 0.0
    %1161 = vmatprep.subr.mxu0 0.0
    %1162 = vmatpush2.msra.mxu0 0.0
    %1163 = vmatprep.subr.mxu0 0.0
    %1164 = vmatpush2.msra.mxu0 0.0
    %1165 = vmatprep.subr.mxu0 0.0
    %1166 = vmatpush2.msra.mxu0 0.0
    %1167 = vmatprep.subr.mxu0 0.0
    %1168 = vmatpush2.msra.mxu0 0.0
    %1169 = vmatprep.subr.mxu0 0.0
    %1170 = vmatpush2.msra.mxu0 0.0
    %1171 = vmatprep.subr.mxu0 0.0
    %1172 = vmatpush2.msra.mxu0 0.0
    %1173 = vmatprep.subr.mxu0 0.0
    %1174 = vmatpush2.msra.mxu0 0.0
    %1175 = vmatprep.subr.mxu0 0.0
    %1176 = vmatpush2.msra.mxu0 0.0
    %1177 = vmatprep.subr.mxu0 0.0
    %1178 = vmatpush2.msra.mxu0 0.0
    %1179 = vmatprep.mubr.f32.mxu0 0.0
    %1180 = vmatmul.mubr.f32.gmra.mxu0 %v1097
    %v1181 = vpop.f32.mrf.mxu0
    %v1182 = vadd.f32 %v1114, %v1181
    %v1183 = vpop.f32.mrf.mxu0
    %1184 = vdwg.mxu0
    %1185 = vst.msk [vmem:[#allocation2] sm:$0xff] %vm135, %v1182
    // Predicated region
    $region50: #{tpu_custom_call.1} parent=1 // pred_check
      _
    $region51: #{tpu_custom_call.1} parent=1 // pred_check_branch
      %1187 = sbr.rel (0) target = $region53
    $region52: #{tpu_custom_call.1} parent=1 // pred_region
      %s1189 = ssub.s32 128, 128
      %1190 = vsyncadd [#allocation3], %s1189
      %s1192 = sshll.u32 [#allocation2], 4
      %s1193 = int_to_ptr.vmem [resolvable:$true] %s1192
      %1195 = dma.vmem_to_hbm [thread:$0]  %s1193, 128, %s12, [#allocation3]
    $region53: #{tpu_custom_call.1} parent=1 // pred_fallthru
      _
    // Predicated region
    $region54: #{tpu_custom_call.1} parent=1 // pred_check
      _
    $region55: #{tpu_custom_call.1} parent=1 // pred_check_branch
      %1197 = sbr.rel (0) target = $region57
    $region56: #{tpu_custom_call.1} parent=1 // pred_region
      %1198 = dma.done [#allocation3], 128
    $region57: #{tpu_custom_call.1} parent=1 // pred_fallthru
      _
    %1199 = vsyncpa [#allocation3], 1

</llo_original>
